<compile_context>
chip_gen: v7x
topology: tpu7x:2x2x1
jax: 0.10.0
libtpu: 0.0.40
codegen_flags: <defaults>
</compile_context>

<pallas_src>
import numpy as np

import jax
import jax.numpy as jnp
from jax.experimental import pallas as pl
from jax.experimental.pallas import tpu as pltpu

D_MODEL = 32
HEADS = 4
D_K = D_MODEL // HEADS
D_FF = 4 * D_MODEL          # FeedForward hidden size
EPS = 1e-5                  # nn.LayerNorm default eps


def _layernorm(x, gamma, beta):
    mu = jnp.mean(x, axis=-1, keepdims=True)
    var = jnp.mean((x - mu) ** 2, axis=-1, keepdims=True)
    return (x - mu) * jax.lax.rsqrt(var + EPS) * gamma + beta


def _make_kernel(block_b, seq_len, with_attn):
    S = seq_len

    def kernel(x_ref, mask_ref,
               g1_ref, be1_ref,
               wqkv_ref, bqkv_ref, wo_ref, bo_ref,
               g2_ref, be2_ref,
               w1_ref, bf1_ref, w2_ref, bf2_ref,
               *outs):
        if with_attn:
            out_ref, attn_ref = outs
        else:
            (out_ref,) = outs
            attn_ref = None

        x = x_ref[...]                          # (block_b*S, D) f32 batch-folded slab
        neg = mask_ref[...] == 0.0              # (block_b, 1, S) -- hoisted out of loops

        # ---- norm_1 (f32 stats) + fused lane-dense QKV projection (bf16 MXU) ----
        x2 = _layernorm(x, g1_ref[...], be1_ref[...])
        qkv = jnp.dot(x2.astype(jnp.bfloat16), wqkv_ref[...],
                      preferred_element_type=jnp.float32) + bqkv_ref[...]
        qkv = qkv.astype(jnp.bfloat16)          # (block_b*S, 3*D) single live slab

        # ---- attention: block-diagonal in batch; per-(b,h) slices taken inside loop ----
        attn_branch = []
        for b in range(block_b):
            lo, hi = b * S, (b + 1) * S
            neg_b = neg[b]                                            # (1, S) padding mask
            ctx_heads = []
            for h in range(HEADS):
                c = h * D_K
                qh = qkv[lo:hi, c:c + D_K]                            # scale folded into Wq
                kh = qkv[lo:hi, D_MODEL + c:D_MODEL + c + D_K]
                vh = qkv[lo:hi, 2 * D_MODEL + c:2 * D_MODEL + c + D_K]
                s = jnp.dot(qh, kh.T, preferred_element_type=jnp.float32)   # (S, S)
                s = jnp.where(neg_b, jnp.float32(-1e9), s)            # masked_fill(mask==0,-1e9)
                m = jnp.max(s, axis=-1, keepdims=True)
                e = jnp.exp(s - m)
                p = e * pl.reciprocal(jnp.sum(e, axis=-1, keepdims=True), approx=True)
                if attn_ref is not None:
                    attn_ref[b, h] = p.astype(attn_ref.dtype)         # bf16 writeback
                ctx_heads.append(jnp.dot(p.astype(jnp.bfloat16), vh,
                                         preferred_element_type=jnp.float32))
            # lane-concat per-head contexts -> single fused ctx @ Wo matmul (K = H*d_k)
            ctx = jnp.concatenate(ctx_heads, axis=-1).astype(jnp.bfloat16)  # (S, H*d_k)
            attn_branch.append(jnp.dot(ctx, wo_ref[...],
                                       preferred_element_type=jnp.float32))
        ao = attn_branch[0] if block_b == 1 else jnp.concatenate(attn_branch, axis=0)

        # residual (dropout_1 is identity in eval mode); no VMEM scratch round-trip
        x = x + ao + bo_ref[...]

        # ---- norm_2 + feed-forward (bf16 MXU operands, f32 accumulate) ----
        x2 = _layernorm(x, g2_ref[...], be2_ref[...])
        h1 = jnp.maximum(
            jnp.dot(x2.astype(jnp.bfloat16), w1_ref[...],
                    preferred_element_type=jnp.float32) + bf1_ref[...], 0.0)
        ff = jnp.dot(h1.astype(jnp.bfloat16), w2_ref[...],
                     preferred_element_type=jnp.float32) + bf2_ref[...]

        # residual (dropout_2 is identity in eval mode)
        out_ref[...] = (x + ff).astype(out_ref.dtype)

    return kernel


def _full_spec(shape):
    nd = len(shape)
    return pl.BlockSpec(shape, lambda i, _nd=nd: (0,) * _nd)


def _prepare_params(params):
    """One-time wrapper-side layout plumbing: fuse Q/K/V lane-dense into a single
    (D, 3*H*d_k) weight, fold the 1/sqrt(d_k) attention scale into Wq/bq, and cast all
    MXU weight operands to bf16 (biases and LayerNorm params stay f32; they are added
    to the f32 accumulators inside the kernel)."""
    scale = 1.0 / float(D_K) ** 0.5
    wqkv = jnp.concatenate([params["wq"] * scale, params["wk"], params["wv"]], axis=-1)
    bqkv = jnp.concatenate([params["bq"] * scale, params["bk"], params["bv"]], axis=-1)
    return [
        params["g1"], params["be1"],
        wqkv.astype(jnp.bfloat16), bqkv,
        params["wo"].astype(jnp.bfloat16), params["bo"],
        params["g2"], params["be2"],
        params["w1"].astype(jnp.bfloat16), params["bf1"],
        params["w2"].astype(jnp.bfloat16), params["bf2"],
    ]


def encoder_layer(x, mask, params, *, return_attn=True, block_b=None,
                  attn_dtype=jnp.bfloat16, vmem_limit_bytes=32 * 1024 * 1024):
    B, S, D = x.shape
    assert D == D_MODEL
    if block_b is None:
        # Keep >= 2 grid steps so ("parallel",) can shard across v7x's two TensorCores,
        # while folding as many batch elements per step as possible (fills the MXU M
        # dimension / 8x128 vregs and amortizes the ~0.35us per-grid-step overhead).
        block_b = max(1, min(8, B // 2))
        while B % block_b:
            block_b -= 1
    assert B % block_b == 0
    num_blocks = B // block_b
    rows = block_b * S

    x2d = x.reshape(B * S, D)                   # batch folded into the sublane dim
    param_arrays = _prepare_params(params)

    in_specs = [
        pl.BlockSpec((rows, D), lambda i: (i, 0)),            # activation slab
        pl.BlockSpec((block_b, 1, S), lambda i: (i, 0, 0)),   # key-padding mask
    ] + [_full_spec(p.shape) for p in param_arrays]

    out_spec_x = pl.BlockSpec((rows, D), lambda i: (i, 0))
    if return_attn:
        out_shape = (jax.ShapeDtypeStruct((B * S, D), jnp.float32),
                     jax.ShapeDtypeStruct((B, HEADS, S, S), attn_dtype))
        out_specs = (out_spec_x,
                     pl.BlockSpec((block_b, HEADS, S, S), lambda i: (i, 0, 0, 0)))
    else:
        out_shape = jax.ShapeDtypeStruct((B * S, D), jnp.float32)
        out_specs = out_spec_x

    flops = (4 * 2 * B * S * D * D                  # QKV + Wo projections
             + 2 * 2 * B * HEADS * S * S * D_K      # scores + context
             + 2 * 2 * B * S * D * D_FF)            # feed-forward
    transcendentals = B * HEADS * S * S + 2 * B * S
    attn_bytes = (B * HEADS * S * S * np.dtype(attn_dtype).itemsize) if return_attn else 0
    bytes_accessed = (4 * (int(x2d.size) + int(mask.size) + B * S * D)
                      + sum(int(p.size) * p.dtype.itemsize for p in param_arrays)
                      + attn_bytes)

    result = pl.pallas_call(
        _make_kernel(block_b, S, return_attn),
        out_shape=out_shape,
        grid=(num_blocks,),
        in_specs=in_specs,
        out_specs=out_specs,
        compiler_params=pltpu.CompilerParams(
            dimension_semantics=("parallel",),
            vmem_limit_bytes=vmem_limit_bytes),
        cost_estimate=pl.CostEstimate(flops=flops,
                                      transcendentals=transcendentals,
                                      bytes_accessed=bytes_accessed),
    )(x2d, mask, *param_arrays)

    if return_attn:
        out2d, attn = result
        return out2d.reshape(B, S, D), attn
    return result.reshape(B, S, D)


def _init_params(key):
    def lin(k, din, dout, scale=0.05):
        kw, kb = jax.random.split(k)
        return (jax.random.normal(kw, (din, dout), jnp.float32) * scale,
                jax.random.normal(kb, (1, dout), jnp.float32) * scale)

    ks = jax.random.split(key, 8)
    wq, bq = lin(ks[0], D_MODEL, D_MODEL)
    wk, bk = lin(ks[1], D_MODEL, D_MODEL)
    wv, bv = lin(ks[2], D_MODEL, D_MODEL)
    wo, bo = lin(ks[3], D_MODEL, D_MODEL)
    w1, bf1 = lin(ks[4], D_MODEL, D_FF)
    w2, bf2 = lin(ks[5], D_FF, D_MODEL)
    g1 = 1.0 + 0.05 * jax.random.normal(ks[6], (1, D_MODEL), jnp.float32)
    be1 = 0.05 * jax.random.normal(jax.random.fold_in(ks[6], 1), (1, D_MODEL), jnp.float32)
    g2 = 1.0 + 0.05 * jax.random.normal(ks[7], (1, D_MODEL), jnp.float32)
    be2 = 0.05 * jax.random.normal(jax.random.fold_in(ks[7], 1), (1, D_MODEL), jnp.float32)
    return dict(g1=g1, be1=be1, wq=wq, bq=bq, wk=wk, bk=bk, wv=wv, bv=bv,
                wo=wo, bo=bo, g2=g2, be2=be2, w1=w1, bf1=bf1, w2=w2, bf2=bf2)


def _reference(x, mask, p):
    """Pure-JAX f32 reference matching the forward pass (eval mode)."""
    def ln(z, g, b):
        mu = z.mean(-1, keepdims=True)
        var = ((z - mu) ** 2).mean(-1, keepdims=True)
        return (z - mu) / jnp.sqrt(var + EPS) * g + b

    B, S, D = x.shape
    x2 = ln(x, p["g1"], p["be1"])
    q = (x2 @ p["wq"] + p["bq"]).reshape(B, S, HEADS, D_K).transpose(0, 2, 1, 3)
    k = (x2 @ p["wk"] + p["bk"]).reshape(B, S, HEADS, D_K).transpose(0, 2, 1, 3)
    v = (x2 @ p["wv"] + p["bv"]).reshape(B, S, HEADS, D_K).transpose(0, 2, 1, 3)
    s = jnp.einsum("bhqd,bhkd->bhqk", q, k) / jnp.sqrt(jnp.float32(D_K))
    s = jnp.where(mask[:, None, :, :] == 0.0, -1e9, s)      # mask.unsqueeze(1) broadcast
    attn = jax.nn.softmax(s, axis=-1)
    o = jnp.einsum("bhqk,bhkd->bhqd", attn, v).transpose(0, 2, 1, 3).reshape(B, S, D)
    x = x + (o @ p["wo"] + p["bo"])
    x2 = ln(x, p["g2"], p["be2"])
    ff = jnp.maximum(x2 @ p["w1"] + p["bf1"], 0.0) @ p["w2"] + p["bf2"]
    return x + ff, attn


if __name__ == "__main__":
    B, S = 2, 8
    key = jax.random.PRNGKey(0)
    kx, kp = jax.random.split(key)
    x = jax.random.normal(kx, (B, S, D_MODEL), jnp.float32)
    # padding mask: batch 0 fully valid, batch 1 has last 2 positions masked out
    lengths = jnp.array([S, S - 2])
    mask = (jnp.arange(S)[None, :] < lengths[:, None]).astype(jnp.float32)[:, None, :]  # (B,1,S)
    params = _init_params(kp)

    out, attn = encoder_layer(x, mask, params, return_attn=True)
    out_only = encoder_layer(x, mask, params, return_attn=False)   # attn never materialized
    jax.block_until_ready((out, attn, out_only))

    ref_out, ref_attn = _reference(x, mask, params)
    # Tolerances allow for bf16 MXU operands / bf16 attention writeback and the EUP
    # approximate reciprocal used in the softmax divide.
    assert jnp.allclose(out, ref_out, atol=2e-2, rtol=2e-2), "output mismatch"
    assert jnp.allclose(attn.astype(jnp.float32), ref_attn, atol=2e-2, rtol=2e-2), \
        "attention mismatch"
    assert jnp.allclose(out_only, ref_out, atol=2e-2, rtol=2e-2), "attn-optional path mismatch"

    print("KERNEL_OK")
</pallas_src>

<mosaic_0001>
module attributes {stable_mosaic.version = 11 : i64} {
  func.func @kernel(%arg0: i32, %arg1: memref<8x32xf32, #tpu.memory_space<vmem>>, %arg2: memref<1x1x8xf32, #tpu.memory_space<vmem>>, %arg3: memref<1x32xf32, #tpu.memory_space<vmem>>, %arg4: memref<1x32xf32, #tpu.memory_space<vmem>>, %arg5: memref<32x96xbf16, #tpu.memory_space<vmem>>, %arg6: memref<1x96xf32, #tpu.memory_space<vmem>>, %arg7: memref<32x32xbf16, #tpu.memory_space<vmem>>, %arg8: memref<1x32xf32, #tpu.memory_space<vmem>>, %arg9: memref<1x32xf32, #tpu.memory_space<vmem>>, %arg10: memref<1x32xf32, #tpu.memory_space<vmem>>, %arg11: memref<32x128xbf16, #tpu.memory_space<vmem>>, %arg12: memref<1x128xf32, #tpu.memory_space<vmem>>, %arg13: memref<128x32xbf16, #tpu.memory_space<vmem>>, %arg14: memref<1x32xf32, #tpu.memory_space<vmem>>, %arg15: memref<8x32xf32, #tpu.memory_space<vmem>>, %arg16: memref<1x4x8x8xbf16, #tpu.memory_space<vmem>>) attributes {dimension_semantics = [#tpu.dimension_semantics<parallel>], iteration_bounds = array<i64: 2>, scalar_prefetch = 0 : i64, scratch_operands = 0 : i64, tpu.core_type = #tpu.core_type<tc>, window_params = [{transform_indices = @transform_0, window_bounds = array<i64: 8, 32>}, {transform_indices = @transform_1, window_bounds = array<i64: 1, 1, 8>}, {pipeline_mode = #tpu.pipeline_mode<synchronous>, transform_indices = @transform_2, window_bounds = array<i64: 1, 32>}, {pipeline_mode = #tpu.pipeline_mode<synchronous>, transform_indices = @transform_3, window_bounds = array<i64: 1, 32>}, {pipeline_mode = #tpu.pipeline_mode<synchronous>, transform_indices = @transform_4, window_bounds = array<i64: 32, 96>}, {pipeline_mode = #tpu.pipeline_mode<synchronous>, transform_indices = @transform_5, window_bounds = array<i64: 1, 96>}, {pipeline_mode = #tpu.pipeline_mode<synchronous>, transform_indices = @transform_6, window_bounds = array<i64: 32, 32>}, {pipeline_mode = #tpu.pipeline_mode<synchronous>, transform_indices = @transform_7, window_bounds = array<i64: 1, 32>}, {pipeline_mode = #tpu.pipeline_mode<synchronous>, transform_indices = @transform_8, window_bounds = array<i64: 1, 32>}, {pipeline_mode = #tpu.pipeline_mode<synchronous>, transform_indices = @transform_9, window_bounds = array<i64: 1, 32>}, {pipeline_mode = #tpu.pipeline_mode<synchronous>, transform_indices = @transform_10, window_bounds = array<i64: 32, 128>}, {pipeline_mode = #tpu.pipeline_mode<synchronous>, transform_indices = @transform_11, window_bounds = array<i64: 1, 128>}, {pipeline_mode = #tpu.pipeline_mode<synchronous>, transform_indices = @transform_12, window_bounds = array<i64: 128, 32>}, {pipeline_mode = #tpu.pipeline_mode<synchronous>, transform_indices = @transform_13, window_bounds = array<i64: 1, 32>}, {transform_indices = @transform_14, window_bounds = array<i64: 8, 32>}, {transform_indices = @transform_15, window_bounds = array<i64: 1, 4, 8, 8>}]} {
    %c0 = arith.constant 0 : index
    %c0_0 = arith.constant 0 : index
    %0 = vector.load %arg1[%c0, %c0_0] : memref<8x32xf32, #tpu.memory_space<vmem>>, vector<8x32xf32>
    %c0_1 = arith.constant 0 : index
    %c0_2 = arith.constant 0 : index
    %c0_3 = arith.constant 0 : index
    %1 = vector.load %arg2[%c0_1, %c0_2, %c0_3] : memref<1x1x8xf32, #tpu.memory_space<vmem>>, vector<1x1x8xf32>
    %cst = arith.constant 0.000000e+00 : f32
    %2 = vector.broadcast %cst : f32 to vector<1x1x8xf32>
    %3 = arith.cmpf oeq, %1, %2 : vector<1x1x8xf32>
    %c0_4 = arith.constant 0 : index
    %c0_5 = arith.constant 0 : index
    %4 = vector.load %arg3[%c0_4, %c0_5] : memref<1x32xf32, #tpu.memory_space<vmem>>, vector<1x32xf32>
    %c0_6 = arith.constant 0 : index
    %c0_7 = arith.constant 0 : index
    %5 = vector.load %arg4[%c0_6, %c0_7] : memref<1x32xf32, #tpu.memory_space<vmem>>, vector<1x32xf32>
    %cst_8 = arith.constant dense<0.000000e+00> : vector<8xf32>
    %6 = vector.multi_reduction <add>, %0, %cst_8 [1] : vector<8x32xf32> to vector<8xf32>
    %7 = vector.shape_cast %6 : vector<8xf32> to vector<8x1xf32>
    %cst_9 = arith.constant 3.200000e+01 : f32
    %8 = vector.broadcast %cst_9 : f32 to vector<8x1xf32>
    %9 = arith.divf %7, %8 : vector<8x1xf32>
    %10 = vector.broadcast %9 : vector<8x1xf32> to vector<8x32xf32>
    %11 = arith.subf %0, %10 : vector<8x32xf32>
    %12 = arith.mulf %11, %11 : vector<8x32xf32>
    %cst_10 = arith.constant dense<0.000000e+00> : vector<8xf32>
    %13 = vector.multi_reduction <add>, %12, %cst_10 [1] : vector<8x32xf32> to vector<8xf32>
    %14 = vector.shape_cast %13 : vector<8xf32> to vector<8x1xf32>
    %cst_11 = arith.constant 3.200000e+01 : f32
    %15 = vector.broadcast %cst_11 : f32 to vector<8x1xf32>
    %16 = arith.divf %14, %15 : vector<8x1xf32>
    %17 = vector.broadcast %9 : vector<8x1xf32> to vector<8x32xf32>
    %18 = arith.subf %0, %17 : vector<8x32xf32>
    %cst_12 = arith.constant 9.99999974E-6 : f32
    %19 = vector.broadcast %cst_12 : f32 to vector<8x1xf32>
    %20 = arith.addf %16, %19 : vector<8x1xf32>
    %21 = math.rsqrt %20 : vector<8x1xf32>
    %22 = vector.broadcast %21 : vector<8x1xf32> to vector<8x32xf32>
    %23 = arith.mulf %18, %22 : vector<8x32xf32>
    %24 = vector.broadcast %4 : vector<1x32xf32> to vector<8x32xf32>
    %25 = arith.mulf %23, %24 : vector<8x32xf32>
    %26 = vector.broadcast %5 : vector<1x32xf32> to vector<8x32xf32>
    %27 = arith.addf %25, %26 : vector<8x32xf32>
    %28 = arith.truncf %27 : vector<8x32xf32> to vector<8x32xbf16>
    %c0_13 = arith.constant 0 : index
    %c0_14 = arith.constant 0 : index
    %29 = vector.load %arg5[%c0_13, %c0_14] : memref<32x96xbf16, #tpu.memory_space<vmem>>, vector<32x96xbf16>
    %cst_15 = arith.constant dense<0.000000e+00> : vector<8x96xf32>
    %30 = tpu.matmul %28, %29, %cst_15 {dimension_numbers = #tpu.dot_dimension_numbers<[1], [0], [0], [1], [0, 0, 1, 1], [], []>} : vector<8x32xbf16>, vector<32x96xbf16>, vector<8x96xf32> -> vector<8x96xf32>
    %c0_16 = arith.constant 0 : index
    %c0_17 = arith.constant 0 : index
    %31 = vector.load %arg6[%c0_16, %c0_17] : memref<1x96xf32, #tpu.memory_space<vmem>>, vector<1x96xf32>
    %32 = vector.broadcast %31 : vector<1x96xf32> to vector<8x96xf32>
    %33 = arith.addf %30, %32 : vector<8x96xf32>
    %34 = arith.truncf %33 : vector<8x96xf32> to vector<8x96xbf16>
    %35 = vector.shape_cast %3 : vector<1x1x8xi1> to vector<1x8xi1>
    %36 = vector.extract_strided_slice %34 {offsets = [0, 0], sizes = [8, 8], strides = [1, 1]} : vector<8x96xbf16> to vector<8x8xbf16>
    %37 = vector.extract_strided_slice %34 {offsets = [0, 32], sizes = [8, 8], strides = [1, 1]} : vector<8x96xbf16> to vector<8x8xbf16>
    %38 = vector.extract_strided_slice %34 {offsets = [0, 64], sizes = [8, 8], strides = [1, 1]} : vector<8x96xbf16> to vector<8x8xbf16>
    %39 = tpu.transpose %37, [1, 0] : vector<8x8xbf16> -> vector<8x8xbf16>
    %cst_18 = arith.constant dense<0.000000e+00> : vector<8x8xf32>
    %40 = tpu.matmul %36, %39, %cst_18 {dimension_numbers = #tpu.dot_dimension_numbers<[1], [0], [0], [1], [0, 0, 1, 1], [], []>} : vector<8x8xbf16>, vector<8x8xbf16>, vector<8x8xf32> -> vector<8x8xf32>
    %cst_19 = arith.constant -1.000000e+09 : f32
    %41 = vector.shape_cast %35 : vector<1x8xi1> to vector<1x8xi1>
    %42 = vector.broadcast %41 : vector<1x8xi1> to vector<8x8xi1>
    %43 = vector.broadcast %cst_19 : f32 to vector<8x8xf32>
    %44 = arith.select %42, %43, %40 : vector<8x8xi1>, vector<8x8xf32>
    %cst_20 = arith.constant dense<0xFF800000> : vector<8xf32>
    %45 = vector.multi_reduction <maximumf>, %44, %cst_20 [1] : vector<8x8xf32> to vector<8xf32>
    %46 = vector.shape_cast %45 : vector<8xf32> to vector<8x1xf32>
    %47 = vector.broadcast %46 : vector<8x1xf32> to vector<8x8xf32>
    %48 = arith.subf %44, %47 : vector<8x8xf32>
    %49 = math.exp %48 : vector<8x8xf32>
    %cst_21 = arith.constant dense<0.000000e+00> : vector<8xf32>
    %50 = vector.multi_reduction <add>, %49, %cst_21 [1] : vector<8x8xf32> to vector<8xf32>
    %51 = vector.shape_cast %50 : vector<8xf32> to vector<8x1xf32>
    %52 = tpu.reciprocal %51 {approx = true} : vector<8x1xf32> -> vector<8x1xf32>
    %53 = vector.broadcast %52 : vector<8x1xf32> to vector<8x8xf32>
    %54 = arith.mulf %49, %53 : vector<8x8xf32>
    %55 = arith.truncf %54 : vector<8x8xf32> to vector<8x8xbf16>
    %c0_22 = arith.constant 0 : index
    %c0_23 = arith.constant 0 : index
    %c0_24 = arith.constant 0 : index
    %c0_25 = arith.constant 0 : index
    %56 = vector.load %arg16[%c0_22, %c0_23, %c0_24, %c0_25] : memref<1x4x8x8xbf16, #tpu.memory_space<vmem>>, vector<1x1x8x8xbf16>
    %57 = vector.shape_cast %56 : vector<1x1x8x8xbf16> to vector<8x8xbf16>
    %58 = vector.shape_cast %55 : vector<8x8xbf16> to vector<1x1x8x8xbf16>
    tpu.vector_store %arg16[%c0_22, %c0_23, %c0_24, %c0_25], %58 {strides = array<i32>} : memref<1x4x8x8xbf16, #tpu.memory_space<vmem>>, vector<1x1x8x8xbf16>,
    %59 = arith.truncf %54 : vector<8x8xf32> to vector<8x8xbf16>
    %cst_26 = arith.constant dense<0.000000e+00> : vector<8x8xf32>
    %60 = tpu.matmul %59, %38, %cst_26 {dimension_numbers = #tpu.dot_dimension_numbers<[1], [0], [0], [1], [0, 0, 1, 1], [], []>} : vector<8x8xbf16>, vector<8x8xbf16>, vector<8x8xf32> -> vector<8x8xf32>
    %61 = vector.extract_strided_slice %34 {offsets = [0, 8], sizes = [8, 8], strides = [1, 1]} : vector<8x96xbf16> to vector<8x8xbf16>
    %62 = vector.extract_strided_slice %34 {offsets = [0, 40], sizes = [8, 8], strides = [1, 1]} : vector<8x96xbf16> to vector<8x8xbf16>
    %63 = vector.extract_strided_slice %34 {offsets = [0, 72], sizes = [8, 8], strides = [1, 1]} : vector<8x96xbf16> to vector<8x8xbf16>
    %64 = tpu.transpose %62, [1, 0] : vector<8x8xbf16> -> vector<8x8xbf16>
    %cst_27 = arith.constant dense<0.000000e+00> : vector<8x8xf32>
    %65 = tpu.matmul %61, %64, %cst_27 {dimension_numbers = #tpu.dot_dimension_numbers<[1], [0], [0], [1], [0, 0, 1, 1], [], []>} : vector<8x8xbf16>, vector<8x8xbf16>, vector<8x8xf32> -> vector<8x8xf32>
    %cst_28 = arith.constant -1.000000e+09 : f32
    %66 = vector.shape_cast %35 : vector<1x8xi1> to vector<1x8xi1>
    %67 = vector.broadcast %66 : vector<1x8xi1> to vector<8x8xi1>
    %68 = vector.broadcast %cst_28 : f32 to vector<8x8xf32>
    %69 = arith.select %67, %68, %65 : vector<8x8xi1>, vector<8x8xf32>
    %cst_29 = arith.constant dense<0xFF800000> : vector<8xf32>
    %70 = vector.multi_reduction <maximumf>, %69, %cst_29 [1] : vector<8x8xf32> to vector<8xf32>
    %71 = vector.shape_cast %70 : vector<8xf32> to vector<8x1xf32>
    %72 = vector.broadcast %71 : vector<8x1xf32> to vector<8x8xf32>
    %73 = arith.subf %69, %72 : vector<8x8xf32>
    %74 = math.exp %73 : vector<8x8xf32>
    %cst_30 = arith.constant dense<0.000000e+00> : vector<8xf32>
    %75 = vector.multi_reduction <add>, %74, %cst_30 [1] : vector<8x8xf32> to vector<8xf32>
    %76 = vector.shape_cast %75 : vector<8xf32> to vector<8x1xf32>
    %77 = tpu.reciprocal %76 {approx = true} : vector<8x1xf32> -> vector<8x1xf32>
    %78 = vector.broadcast %77 : vector<8x1xf32> to vector<8x8xf32>
    %79 = arith.mulf %74, %78 : vector<8x8xf32>
    %80 = arith.truncf %79 : vector<8x8xf32> to vector<8x8xbf16>
    %c0_31 = arith.constant 0 : index
    %c1 = arith.constant 1 : index
    %c0_32 = arith.constant 0 : index
    %c0_33 = arith.constant 0 : index
    %81 = vector.load %arg16[%c0_31, %c1, %c0_32, %c0_33] : memref<1x4x8x8xbf16, #tpu.memory_space<vmem>>, vector<1x1x8x8xbf16>
    %82 = vector.shape_cast %81 : vector<1x1x8x8xbf16> to vector<8x8xbf16>
    %83 = vector.shape_cast %80 : vector<8x8xbf16> to vector<1x1x8x8xbf16>
    tpu.vector_store %arg16[%c0_31, %c1, %c0_32, %c0_33], %83 {strides = array<i32>} : memref<1x4x8x8xbf16, #tpu.memory_space<vmem>>, vector<1x1x8x8xbf16>,
    %84 = arith.truncf %79 : vector<8x8xf32> to vector<8x8xbf16>
    %cst_34 = arith.constant dense<0.000000e+00> : vector<8x8xf32>
    %85 = tpu.matmul %84, %63, %cst_34 {dimension_numbers = #tpu.dot_dimension_numbers<[1], [0], [0], [1], [0, 0, 1, 1], [], []>} : vector<8x8xbf16>, vector<8x8xbf16>, vector<8x8xf32> -> vector<8x8xf32>
    %86 = vector.extract_strided_slice %34 {offsets = [0, 16], sizes = [8, 8], strides = [1, 1]} : vector<8x96xbf16> to vector<8x8xbf16>
    %87 = vector.extract_strided_slice %34 {offsets = [0, 48], sizes = [8, 8], strides = [1, 1]} : vector<8x96xbf16> to vector<8x8xbf16>
    %88 = vector.extract_strided_slice %34 {offsets = [0, 80], sizes = [8, 8], strides = [1, 1]} : vector<8x96xbf16> to vector<8x8xbf16>
    %89 = tpu.transpose %87, [1, 0] : vector<8x8xbf16> -> vector<8x8xbf16>
    %cst_35 = arith.constant dense<0.000000e+00> : vector<8x8xf32>
    %90 = tpu.matmul %86, %89, %cst_35 {dimension_numbers = #tpu.dot_dimension_numbers<[1], [0], [0], [1], [0, 0, 1, 1], [], []>} : vector<8x8xbf16>, vector<8x8xbf16>, vector<8x8xf32> -> vector<8x8xf32>
    %cst_36 = arith.constant -1.000000e+09 : f32
    %91 = vector.shape_cast %35 : vector<1x8xi1> to vector<1x8xi1>
    %92 = vector.broadcast %91 : vector<1x8xi1> to vector<8x8xi1>
    %93 = vector.broadcast %cst_36 : f32 to vector<8x8xf32>
    %94 = arith.select %92, %93, %90 : vector<8x8xi1>, vector<8x8xf32>
    %cst_37 = arith.constant dense<0xFF800000> : vector<8xf32>
    %95 = vector.multi_reduction <maximumf>, %94, %cst_37 [1] : vector<8x8xf32> to vector<8xf32>
    %96 = vector.shape_cast %95 : vector<8xf32> to vector<8x1xf32>
    %97 = vector.broadcast %96 : vector<8x1xf32> to vector<8x8xf32>
    %98 = arith.subf %94, %97 : vector<8x8xf32>
    %99 = math.exp %98 : vector<8x8xf32>
    %cst_38 = arith.constant dense<0.000000e+00> : vector<8xf32>
    %100 = vector.multi_reduction <add>, %99, %cst_38 [1] : vector<8x8xf32> to vector<8xf32>
    %101 = vector.shape_cast %100 : vector<8xf32> to vector<8x1xf32>
    %102 = tpu.reciprocal %101 {approx = true} : vector<8x1xf32> -> vector<8x1xf32>
    %103 = vector.broadcast %102 : vector<8x1xf32> to vector<8x8xf32>
    %104 = arith.mulf %99, %103 : vector<8x8xf32>
    %105 = arith.truncf %104 : vector<8x8xf32> to vector<8x8xbf16>
    %c0_39 = arith.constant 0 : index
    %c2 = arith.constant 2 : index
    %c0_40 = arith.constant 0 : index
    %c0_41 = arith.constant 0 : index
    %106 = vector.load %arg16[%c0_39, %c2, %c0_40, %c0_41] : memref<1x4x8x8xbf16, #tpu.memory_space<vmem>>, vector<1x1x8x8xbf16>
    %107 = vector.shape_cast %106 : vector<1x1x8x8xbf16> to vector<8x8xbf16>
    %108 = vector.shape_cast %105 : vector<8x8xbf16> to vector<1x1x8x8xbf16>
    tpu.vector_store %arg16[%c0_39, %c2, %c0_40, %c0_41], %108 {strides = array<i32>} : memref<1x4x8x8xbf16, #tpu.memory_space<vmem>>, vector<1x1x8x8xbf16>,
    %109 = arith.truncf %104 : vector<8x8xf32> to vector<8x8xbf16>
    %cst_42 = arith.constant dense<0.000000e+00> : vector<8x8xf32>
    %110 = tpu.matmul %109, %88, %cst_42 {dimension_numbers = #tpu.dot_dimension_numbers<[1], [0], [0], [1], [0, 0, 1, 1], [], []>} : vector<8x8xbf16>, vector<8x8xbf16>, vector<8x8xf32> -> vector<8x8xf32>
    %111 = vector.extract_strided_slice %34 {offsets = [0, 24], sizes = [8, 8], strides = [1, 1]} : vector<8x96xbf16> to vector<8x8xbf16>
    %112 = vector.extract_strided_slice %34 {offsets = [0, 56], sizes = [8, 8], strides = [1, 1]} : vector<8x96xbf16> to vector<8x8xbf16>
    %113 = vector.extract_strided_slice %34 {offsets = [0, 88], sizes = [8, 8], strides = [1, 1]} : vector<8x96xbf16> to vector<8x8xbf16>
    %114 = tpu.transpose %112, [1, 0] : vector<8x8xbf16> -> vector<8x8xbf16>
    %cst_43 = arith.constant dense<0.000000e+00> : vector<8x8xf32>
    %115 = tpu.matmul %111, %114, %cst_43 {dimension_numbers = #tpu.dot_dimension_numbers<[1], [0], [0], [1], [0, 0, 1, 1], [], []>} : vector<8x8xbf16>, vector<8x8xbf16>, vector<8x8xf32> -> vector<8x8xf32>
    %cst_44 = arith.constant -1.000000e+09 : f32
    %116 = vector.shape_cast %35 : vector<1x8xi1> to vector<1x8xi1>
    %117 = vector.broadcast %116 : vector<1x8xi1> to vector<8x8xi1>
    %118 = vector.broadcast %cst_44 : f32 to vector<8x8xf32>
    %119 = arith.select %117, %118, %115 : vector<8x8xi1>, vector<8x8xf32>
    %cst_45 = arith.constant dense<0xFF800000> : vector<8xf32>
    %120 = vector.multi_reduction <maximumf>, %119, %cst_45 [1] : vector<8x8xf32> to vector<8xf32>
    %121 = vector.shape_cast %120 : vector<8xf32> to vector<8x1xf32>
    %122 = vector.broadcast %121 : vector<8x1xf32> to vector<8x8xf32>
    %123 = arith.subf %119, %122 : vector<8x8xf32>
    %124 = math.exp %123 : vector<8x8xf32>
    %cst_46 = arith.constant dense<0.000000e+00> : vector<8xf32>
    %125 = vector.multi_reduction <add>, %124, %cst_46 [1] : vector<8x8xf32> to vector<8xf32>
    %126 = vector.shape_cast %125 : vector<8xf32> to vector<8x1xf32>
    %127 = tpu.reciprocal %126 {approx = true} : vector<8x1xf32> -> vector<8x1xf32>
    %128 = vector.broadcast %127 : vector<8x1xf32> to vector<8x8xf32>
    %129 = arith.mulf %124, %128 : vector<8x8xf32>
    %130 = arith.truncf %129 : vector<8x8xf32> to vector<8x8xbf16>
    %c0_47 = arith.constant 0 : index
    %c3 = arith.constant 3 : index
    %c0_48 = arith.constant 0 : index
    %c0_49 = arith.constant 0 : index
    %131 = vector.load %arg16[%c0_47, %c3, %c0_48, %c0_49] : memref<1x4x8x8xbf16, #tpu.memory_space<vmem>>, vector<1x1x8x8xbf16>
    %132 = vector.shape_cast %131 : vector<1x1x8x8xbf16> to vector<8x8xbf16>
    %133 = vector.shape_cast %130 : vector<8x8xbf16> to vector<1x1x8x8xbf16>
    tpu.vector_store %arg16[%c0_47, %c3, %c0_48, %c0_49], %133 {strides = array<i32>} : memref<1x4x8x8xbf16, #tpu.memory_space<vmem>>, vector<1x1x8x8xbf16>,
    %134 = arith.truncf %129 : vector<8x8xf32> to vector<8x8xbf16>
    %cst_50 = arith.constant dense<0.000000e+00> : vector<8x8xf32>
    %135 = tpu.matmul %134, %113, %cst_50 {dimension_numbers = #tpu.dot_dimension_numbers<[1], [0], [0], [1], [0, 0, 1, 1], [], []>} : vector<8x8xbf16>, vector<8x8xbf16>, vector<8x8xf32> -> vector<8x8xf32>
    %136 = tpu.concatenate %60, %85, %110, %135 in 1 : vector<8x8xf32>, vector<8x8xf32>, vector<8x8xf32>, vector<8x8xf32> -> vector<8x32xf32>
    %137 = arith.truncf %136 : vector<8x32xf32> to vector<8x32xbf16>
    %c0_51 = arith.constant 0 : index
    %c0_52 = arith.constant 0 : index
    %138 = vector.load %arg7[%c0_51, %c0_52] : memref<32x32xbf16, #tpu.memory_space<vmem>>, vector<32x32xbf16>
    %cst_53 = arith.constant dense<0.000000e+00> : vector<8x32xf32>
    %139 = tpu.matmul %137, %138, %cst_53 {dimension_numbers = #tpu.dot_dimension_numbers<[1], [0], [0], [1], [0, 0, 1, 1], [], []>} : vector<8x32xbf16>, vector<32x32xbf16>, vector<8x32xf32> -> vector<8x32xf32>
    %140 = arith.addf %0, %139 : vector<8x32xf32>
    %c0_54 = arith.constant 0 : index
    %c0_55 = arith.constant 0 : index
    %141 = vector.load %arg8[%c0_54, %c0_55] : memref<1x32xf32, #tpu.memory_space<vmem>>, vector<1x32xf32>
    %142 = vector.broadcast %141 : vector<1x32xf32> to vector<8x32xf32>
    %143 = arith.addf %140, %142 : vector<8x32xf32>
    %c0_56 = arith.constant 0 : index
    %c0_57 = arith.constant 0 : index
    %144 = vector.load %arg9[%c0_56, %c0_57] : memref<1x32xf32, #tpu.memory_space<vmem>>, vector<1x32xf32>
    %c0_58 = arith.constant 0 : index
    %c0_59 = arith.constant 0 : index
    %145 = vector.load %arg10[%c0_58, %c0_59] : memref<1x32xf32, #tpu.memory_space<vmem>>, vector<1x32xf32>
    %cst_60 = arith.constant dense<0.000000e+00> : vector<8xf32>
    %146 = vector.multi_reduction <add>, %143, %cst_60 [1] : vector<8x32xf32> to vector<8xf32>
    %147 = vector.shape_cast %146 : vector<8xf32> to vector<8x1xf32>
    %cst_61 = arith.constant 3.200000e+01 : f32
    %148 = vector.broadcast %cst_61 : f32 to vector<8x1xf32>
    %149 = arith.divf %147, %148 : vector<8x1xf32>
    %150 = vector.broadcast %149 : vector<8x1xf32> to vector<8x32xf32>
    %151 = arith.subf %143, %150 : vector<8x32xf32>
    %152 = arith.mulf %151, %151 : vector<8x32xf32>
    %cst_62 = arith.constant dense<0.000000e+00> : vector<8xf32>
    %153 = vector.multi_reduction <add>, %152, %cst_62 [1] : vector<8x32xf32> to vector<8xf32>
    %154 = vector.shape_cast %153 : vector<8xf32> to vector<8x1xf32>
    %cst_63 = arith.constant 3.200000e+01 : f32
    %155 = vector.broadcast %cst_63 : f32 to vector<8x1xf32>
    %156 = arith.divf %154, %155 : vector<8x1xf32>
    %157 = vector.broadcast %149 : vector<8x1xf32> to vector<8x32xf32>
    %158 = arith.subf %143, %157 : vector<8x32xf32>
    %cst_64 = arith.constant 9.99999974E-6 : f32
    %159 = vector.broadcast %cst_64 : f32 to vector<8x1xf32>
    %160 = arith.addf %156, %159 : vector<8x1xf32>
    %161 = math.rsqrt %160 : vector<8x1xf32>
    %162 = vector.broadcast %161 : vector<8x1xf32> to vector<8x32xf32>
    %163 = arith.mulf %158, %162 : vector<8x32xf32>
    %164 = vector.broadcast %144 : vector<1x32xf32> to vector<8x32xf32>
    %165 = arith.mulf %163, %164 : vector<8x32xf32>
    %166 = vector.broadcast %145 : vector<1x32xf32> to vector<8x32xf32>
    %167 = arith.addf %165, %166 : vector<8x32xf32>
    %168 = arith.truncf %167 : vector<8x32xf32> to vector<8x32xbf16>
    %c0_65 = arith.constant 0 : index
    %c0_66 = arith.constant 0 : index
    %169 = vector.load %arg11[%c0_65, %c0_66] : memref<32x128xbf16, #tpu.memory_space<vmem>>, vector<32x128xbf16>
    %cst_67 = arith.constant dense<0.000000e+00> : vector<8x128xf32>
    %170 = tpu.matmul %168, %169, %cst_67 {dimension_numbers = #tpu.dot_dimension_numbers<[1], [0], [0], [1], [0, 0, 1, 1], [], []>} : vector<8x32xbf16>, vector<32x128xbf16>, vector<8x128xf32> -> vector<8x128xf32>
    %c0_68 = arith.constant 0 : index
    %c0_69 = arith.constant 0 : index
    %171 = vector.load %arg12[%c0_68, %c0_69] : memref<1x128xf32, #tpu.memory_space<vmem>>, vector<1x128xf32>
    %172 = vector.broadcast %171 : vector<1x128xf32> to vector<8x128xf32>
    %173 = arith.addf %170, %172 : vector<8x128xf32>
    %cst_70 = arith.constant 0.000000e+00 : f32
    %174 = vector.broadcast %cst_70 : f32 to vector<8x128xf32>
    %175 = arith.maximumf %173, %174 : vector<8x128xf32>
    %176 = arith.truncf %175 : vector<8x128xf32> to vector<8x128xbf16>
    %c0_71 = arith.constant 0 : index
    %c0_72 = arith.constant 0 : index
    %177 = vector.load %arg13[%c0_71, %c0_72] : memref<128x32xbf16, #tpu.memory_space<vmem>>, vector<128x32xbf16>
    %cst_73 = arith.constant dense<0.000000e+00> : vector<8x32xf32>
    %178 = tpu.matmul %176, %177, %cst_73 {dimension_numbers = #tpu.dot_dimension_numbers<[1], [0], [0], [1], [0, 0, 1, 1], [], []>} : vector<8x128xbf16>, vector<128x32xbf16>, vector<8x32xf32> -> vector<8x32xf32>
    %c0_74 = arith.constant 0 : index
    %c0_75 = arith.constant 0 : index
    %179 = vector.load %arg14[%c0_74, %c0_75] : memref<1x32xf32, #tpu.memory_space<vmem>>, vector<1x32xf32>
    %180 = vector.broadcast %179 : vector<1x32xf32> to vector<8x32xf32>
    %181 = arith.addf %178, %180 : vector<8x32xf32>
    %182 = arith.addf %143, %181 : vector<8x32xf32>
    %c0_76 = arith.constant 0 : index
    %c0_77 = arith.constant 0 : index
    %183 = vector.load %arg15[%c0_76, %c0_77] : memref<8x32xf32, #tpu.memory_space<vmem>>, vector<8x32xf32>
    tpu.vector_store %arg15[%c0_76, %c0_77], %182 {strides = array<i32>} : memref<8x32xf32, #tpu.memory_space<vmem>>, vector<8x32xf32>,
    return
  }
  func.func @transform_0(%arg0: i32) -> (i32, i32) {
    %c0_i32 = arith.constant 0 : i32
    %c0_i32_0 = arith.constant 0 : i32
    return %arg0, %c0_i32 : i32, i32
  }
  func.func @transform_1(%arg0: i32) -> (i32, i32, i32) {
    %c0_i32 = arith.constant 0 : i32
    %c0_i32_0 = arith.constant 0 : i32
    %c0_i32_1 = arith.constant 0 : i32
    return %arg0, %c0_i32, %c0_i32_0 : i32, i32, i32
  }
  func.func @transform_2(%arg0: i32) -> (i32, i32) {
    %c0_i32 = arith.constant 0 : i32
    %c0_i32_0 = arith.constant 0 : i32
    %c0_i32_1 = arith.constant 0 : i32
    return %c0_i32, %c0_i32_0 : i32, i32
  }
  func.func @transform_3(%arg0: i32) -> (i32, i32) {
    %c0_i32 = arith.constant 0 : i32
    %c0_i32_0 = arith.constant 0 : i32
    %c0_i32_1 = arith.constant 0 : i32
    return %c0_i32, %c0_i32_0 : i32, i32
  }
  func.func @transform_4(%arg0: i32) -> (i32, i32) {
    %c0_i32 = arith.constant 0 : i32
    %c0_i32_0 = arith.constant 0 : i32
    %c0_i32_1 = arith.constant 0 : i32
    return %c0_i32, %c0_i32_0 : i32, i32
  }
  func.func @transform_5(%arg0: i32) -> (i32, i32) {
    %c0_i32 = arith.constant 0 : i32
    %c0_i32_0 = arith.constant 0 : i32
    %c0_i32_1 = arith.constant 0 : i32
    return %c0_i32, %c0_i32_0 : i32, i32
  }
  func.func @transform_6(%arg0: i32) -> (i32, i32) {
    %c0_i32 = arith.constant 0 : i32
    %c0_i32_0 = arith.constant 0 : i32
    %c0_i32_1 = arith.constant 0 : i32
    return %c0_i32, %c0_i32_0 : i32, i32
  }
  func.func @transform_7(%arg0: i32) -> (i32, i32) {
    %c0_i32 = arith.constant 0 : i32
    %c0_i32_0 = arith.constant 0 : i32
    %c0_i32_1 = arith.constant 0 : i32
    return %c0_i32, %c0_i32_0 : i32, i32
  }
  func.func @transform_8(%arg0: i32) -> (i32, i32) {
    %c0_i32 = arith.constant 0 : i32
    %c0_i32_0 = arith.constant 0 : i32
    %c0_i32_1 = arith.constant 0 : i32
    return %c0_i32, %c0_i32_0 : i32, i32
  }
  func.func @transform_9(%arg0: i32) -> (i32, i32) {
    %c0_i32 = arith.constant 0 : i32
    %c0_i32_0 = arith.constant 0 : i32
    %c0_i32_1 = arith.constant 0 : i32
    return %c0_i32, %c0_i32_0 : i32, i32
  }
  func.func @transform_10(%arg0: i32) -> (i32, i32) {
    %c0_i32 = arith.constant 0 : i32
    %c0_i32_0 = arith.constant 0 : i32
    %c0_i32_1 = arith.constant 0 : i32
    return %c0_i32, %c0_i32_0 : i32, i32
  }
  func.func @transform_11(%arg0: i32) -> (i32, i32) {
    %c0_i32 = arith.constant 0 : i32
    %c0_i32_0 = arith.constant 0 : i32
    %c0_i32_1 = arith.constant 0 : i32
    return %c0_i32, %c0_i32_0 : i32, i32
  }
  func.func @transform_12(%arg0: i32) -> (i32, i32) {
    %c0_i32 = arith.constant 0 : i32
    %c0_i32_0 = arith.constant 0 : i32
    %c0_i32_1 = arith.constant 0 : i32
    return %c0_i32, %c0_i32_0 : i32, i32
  }
  func.func @transform_13(%arg0: i32) -> (i32, i32) {
    %c0_i32 = arith.constant 0 : i32
    %c0_i32_0 = arith.constant 0 : i32
    %c0_i32_1 = arith.constant 0 : i32
    return %c0_i32, %c0_i32_0 : i32, i32
  }
  func.func @transform_14(%arg0: i32) -> (i32, i32) {
    %c0_i32 = arith.constant 0 : i32
    %c0_i32_0 = arith.constant 0 : i32
    return %arg0, %c0_i32 : i32, i32
  }
  func.func @transform_15(%arg0: i32) -> (i32, i32, i32, i32) {
    %c0_i32 = arith.constant 0 : i32
    %c0_i32_0 = arith.constant 0 : i32
    %c0_i32_1 = arith.constant 0 : i32
    %c0_i32_2 = arith.constant 0 : i32
    return %arg0, %c0_i32, %c0_i32_0, %c0_i32_1 : i32, i32, i32, i32
  }
}

</mosaic_0001>

<llo_original>
// kernel: tpu_custom_call.1
$region0: #{tpu_custom_call.1}
  #allocation0 [shape = 'u32[]', space=smem, size = 0x4, offset = 0x4, fixed_abs, tag = 'smem constant byte address 0x4 - core index']
  #allocation1 [shape = 'u32[144,128]{1,0:T(1,128)}', space=vmem, size = 0x12000, scoped, tag = 'internal scratch']
  %s0 = inlined_call_operand.vmem [shape: f32[16,32], index: 0, kind: input, shape index: {}]
  %s1 = inlined_call_operand.vmem [shape: f32[2,1,8], index: 1, kind: input, shape index: {}]
  %s2 = inlined_call_operand.vmem [shape: f32[1,32], index: 2, kind: input, shape index: {}]
  %s3 = inlined_call_operand.vmem [shape: f32[1,32], index: 3, kind: input, shape index: {}]
  %s4 = inlined_call_operand.vmem [shape: bf16[32,96], index: 4, kind: input, shape index: {}]
  %s5 = inlined_call_operand.vmem [shape: f32[1,96], index: 5, kind: input, shape index: {}]
  %s6 = inlined_call_operand.vmem [shape: bf16[32,32], index: 6, kind: input, shape index: {}]
  %s7 = inlined_call_operand.vmem [shape: f32[1,32], index: 7, kind: input, shape index: {}]
  %s8 = inlined_call_operand.vmem [shape: f32[1,32], index: 8, kind: input, shape index: {}]
  %s9 = inlined_call_operand.vmem [shape: f32[1,32], index: 9, kind: input, shape index: {}]
  %s10 = inlined_call_operand.vmem [shape: bf16[32,128], index: 10, kind: input, shape index: {}]
  %s11 = inlined_call_operand.vmem [shape: f32[1,128], index: 11, kind: input, shape index: {}]
  %s12 = inlined_call_operand.vmem [shape: bf16[128,32], index: 12, kind: input, shape index: {}]
  %s13 = inlined_call_operand.vmem [shape: f32[1,32], index: 13, kind: input, shape index: {}]
  %s14 = inlined_call_operand.hbm [shape: f32[16,32], index: 14, kind: output, shape index: {0}]
  %s15 = inlined_call_operand.hbm [shape: bf16[2,4,8,8], index: 15, kind: output, shape index: {1}]
  %16 = xla_tuple %s14, %s15
  %s17 = sld [smem:[#allocation0]]
  $region97: #{tpu_custom_call.1} parent=0
    _
  %s19 = ssub.s32 1, %s17
  %s20 = scalar_select 0, %s19, %s17
  $region1: #{tpu_custom_call.1} parent=0
    #allocation2 [shape = 'u8[8192]{0}', space=vmem, size = 0x2000, scoped, tag = 'output window, operand 0']
    #allocation3 [shape = 's32[2]{0}', space=sflag, size = 0x8, scoped, tag = 'scoped memory for tpu_custom_call.1']
    #allocation4 [shape = 'u8[16384]{0}', space=vmem, size = 0x4000, scoped, tag = 'output window, operand 1']
    #allocation5 [shape = 's32[2]{0}', space=sflag, size = 0x8, scoped, tag = 'scoped memory for tpu_custom_call.1']
    %21 = vsyncpa [#allocation3], 0
    %s22 = scalar_lea.sflag [#allocation3], 1
    %23 = vsyncpa %s22, 0
    %24 = vsyncpa [#allocation5], 0
    %s25 = scalar_lea.sflag [#allocation5], 1
    %26 = vsyncpa %s25, 0
    loop: start=0, step=1, limit=4
    $region2: #{tpu_custom_call.1} parent=1 // loop_pre_header
      _
    $region3: #{tpu_custom_call.1} parent=1 // loop_header
      %s28 = sphi 0, %s32
      %p29 = scmp.ge.s32.totalorder %s28, 4
      %s38 = sphi 0, %s40
      %s41 = sphi 0, %s38
      %s42 = sphi 0, %s41
      %s58 = sphi 0, %s42
      %s64 = sphi 0, %s66
      %s67 = sphi 0, %s64
      %s68 = sphi 0, %s67
      %s84 = sphi 0, %s68
      %s88 = sphi 0, %s88
      %s90 = sphi 0, %s88
      %s91 = sphi 0, %s90
      %s105 = sphi 0, %s91
      %s109 = sphi 0, %s109
      %s111 = sphi 0, %s109
      %s112 = sphi 0, %s111
      %s126 = sphi 0, %s112
      %s130 = sphi 0, %s130
      %s132 = sphi 0, %s130
      %s133 = sphi 0, %s132
      %s147 = sphi 0, %s133
      %s151 = sphi 0, %s151
      %s153 = sphi 0, %s151
      %s154 = sphi 0, %s153
      %s168 = sphi 0, %s154
      %s172 = sphi 0, %s172
      %s174 = sphi 0, %s172
      %s175 = sphi 0, %s174
      %s189 = sphi 0, %s175
      %s193 = sphi 0, %s193
      %s195 = sphi 0, %s193
      %s196 = sphi 0, %s195
      %s210 = sphi 0, %s196
      %s214 = sphi 0, %s214
      %s216 = sphi 0, %s214
      %s217 = sphi 0, %s216
      %s231 = sphi 0, %s217
      %s235 = sphi 0, %s235
      %s237 = sphi 0, %s235
      %s238 = sphi 0, %s237
      %s252 = sphi 0, %s238
      %s256 = sphi 0, %s256
      %s258 = sphi 0, %s256
      %s259 = sphi 0, %s258
      %s273 = sphi 0, %s259
      %s277 = sphi 0, %s277
      %s279 = sphi 0, %s277
      %s280 = sphi 0, %s279
      %s294 = sphi 0, %s280
      %s298 = sphi 0, %s298
      %s300 = sphi 0, %s298
      %s301 = sphi 0, %s300
      %s315 = sphi 0, %s301
      %s319 = sphi 0, %s319
      %s321 = sphi 0, %s319
      %s322 = sphi 0, %s321
      %s336 = sphi 0, %s322
      %s342 = sphi 0, %s344
      %s345 = sphi 0, %s342
      %s346 = sphi 0, %s345
      %s362 = sphi 0, %s346
      %s368 = sphi 0, %s370
      %s371 = sphi 0, %s368
      %s372 = sphi 0, %s371
      %s388 = sphi 0, %s372
    $region4: #{tpu_custom_call.1} parent=1 // loop_header_branch
      %31 = sbr.rel (%p29) target = $region8
    $region5: #{tpu_custom_call.1} parent=1 // loop_body
      %s33 = ssub.s32 %s28, 1
      %s34 = ssub.s32 %s28, 2
      %s35 = sadd.s32 %s28, 1
      %s36 = ssub.s32 %s28, %s35
      %p37 = scmp.eq.s32.totalorder %s36, 0
      %s39 = sadd.s32 %s38, 1
      %s40 = scalar_select %p37, %s38, %s39
      %p43 = pneg %p37
      %p44 = scmp.eq.s32.totalorder %s28, 1
      %p45 = por %p43, %p44
      %p46 = scmp.ne.s32.totalorder %s38, %s41
      %p47 = scmp.eq.s32.totalorder %s28, 0
      %p48 = por %p46, %p47
      %p49 = scmp.ne.s32.totalorder %s38, %s41
      %p50 = scmp.eq.s32.totalorder %s33, 1
      %p51 = por %p49, %p50
      %p52 = scmp.ne.s32.totalorder %s41, %s42
      %p53 = scmp.eq.s32.totalorder %s33, 0
      %p54 = por %p52, %p53
      %p55 = scmp.ne.s32.totalorder %s41, %s42
      %p56 = scmp.eq.s32.totalorder %s34, 1
      %p57 = por %p55, %p56
      %p59 = scmp.ne.s32.totalorder %s42, %s58
      %p60 = scmp.eq.s32.totalorder %s34, 0
      %p61 = por %p59, %p60
      %s62 = ssub.s32 %s28, %s35
      %p63 = scmp.eq.s32.totalorder %s62, 0
      %s65 = sadd.s32 %s64, 1
      %s66 = scalar_select %p63, %s64, %s65
      %p69 = pneg %p63
      %p70 = scmp.eq.s32.totalorder %s28, 1
      %p71 = por %p69, %p70
      %p72 = scmp.ne.s32.totalorder %s64, %s67
      %p73 = scmp.eq.s32.totalorder %s28, 0
      %p74 = por %p72, %p73
      %p75 = scmp.ne.s32.totalorder %s64, %s67
      %p76 = scmp.eq.s32.totalorder %s33, 1
      %p77 = por %p75, %p76
      %p78 = scmp.ne.s32.totalorder %s67, %s68
      %p79 = scmp.eq.s32.totalorder %s33, 0
      %p80 = por %p78, %p79
      %p81 = scmp.ne.s32.totalorder %s67, %s68
      %p82 = scmp.eq.s32.totalorder %s34, 1
      %p83 = por %p81, %p82
      %p85 = scmp.ne.s32.totalorder %s68, %s84
      %p86 = scmp.eq.s32.totalorder %s34, 0
      %p87 = por %p85, %p86
      %s89 = sadd.s32 %s88, 1
      %p92 = scmp.eq.s32.totalorder %s28, 1
      %p93 = scmp.ne.s32.totalorder %s88, %s90
      %p94 = scmp.eq.s32.totalorder %s28, 0
      %p95 = por %p93, %p94
      %p96 = scmp.ne.s32.totalorder %s88, %s90
      %p97 = scmp.eq.s32.totalorder %s33, 1
      %p98 = por %p96, %p97
      %p99 = scmp.ne.s32.totalorder %s90, %s91
      %p100 = scmp.eq.s32.totalorder %s33, 0
      %p101 = por %p99, %p100
      %p102 = scmp.ne.s32.totalorder %s90, %s91
      %p103 = scmp.eq.s32.totalorder %s34, 1
      %p104 = por %p102, %p103
      %p106 = scmp.ne.s32.totalorder %s91, %s105
      %p107 = scmp.eq.s32.totalorder %s34, 0
      %p108 = por %p106, %p107
      %s110 = sadd.s32 %s109, 1
      %p113 = scmp.eq.s32.totalorder %s28, 1
      %p114 = scmp.ne.s32.totalorder %s109, %s111
      %p115 = scmp.eq.s32.totalorder %s28, 0
      %p116 = por %p114, %p115
      %p117 = scmp.ne.s32.totalorder %s109, %s111
      %p118 = scmp.eq.s32.totalorder %s33, 1
      %p119 = por %p117, %p118
      %p120 = scmp.ne.s32.totalorder %s111, %s112
      %p121 = scmp.eq.s32.totalorder %s33, 0
      %p122 = por %p120, %p121
      %p123 = scmp.ne.s32.totalorder %s111, %s112
      %p124 = scmp.eq.s32.totalorder %s34, 1
      %p125 = por %p123, %p124
      %p127 = scmp.ne.s32.totalorder %s112, %s126
      %p128 = scmp.eq.s32.totalorder %s34, 0
      %p129 = por %p127, %p128
      %s131 = sadd.s32 %s130, 1
      %p134 = scmp.eq.s32.totalorder %s28, 1
      %p135 = scmp.ne.s32.totalorder %s130, %s132
      %p136 = scmp.eq.s32.totalorder %s28, 0
      %p137 = por %p135, %p136
      %p138 = scmp.ne.s32.totalorder %s130, %s132
      %p139 = scmp.eq.s32.totalorder %s33, 1
      %p140 = por %p138, %p139
      %p141 = scmp.ne.s32.totalorder %s132, %s133
      %p142 = scmp.eq.s32.totalorder %s33, 0
      %p143 = por %p141, %p142
      %p144 = scmp.ne.s32.totalorder %s132, %s133
      %p145 = scmp.eq.s32.totalorder %s34, 1
      %p146 = por %p144, %p145
      %p148 = scmp.ne.s32.totalorder %s133, %s147
      %p149 = scmp.eq.s32.totalorder %s34, 0
      %p150 = por %p148, %p149
      %s152 = sadd.s32 %s151, 1
      %p155 = scmp.eq.s32.totalorder %s28, 1
      %p156 = scmp.ne.s32.totalorder %s151, %s153
      %p157 = scmp.eq.s32.totalorder %s28, 0
      %p158 = por %p156, %p157
      %p159 = scmp.ne.s32.totalorder %s151, %s153
      %p160 = scmp.eq.s32.totalorder %s33, 1
      %p161 = por %p159, %p160
      %p162 = scmp.ne.s32.totalorder %s153, %s154
      %p163 = scmp.eq.s32.totalorder %s33, 0
      %p164 = por %p162, %p163
      %p165 = scmp.ne.s32.totalorder %s153, %s154
      %p166 = scmp.eq.s32.totalorder %s34, 1
      %p167 = por %p165, %p166
      %p169 = scmp.ne.s32.totalorder %s154, %s168
      %p170 = scmp.eq.s32.totalorder %s34, 0
      %p171 = por %p169, %p170
      %s173 = sadd.s32 %s172, 1
      %p176 = scmp.eq.s32.totalorder %s28, 1
      %p177 = scmp.ne.s32.totalorder %s172, %s174
      %p178 = scmp.eq.s32.totalorder %s28, 0
      %p179 = por %p177, %p178
      %p180 = scmp.ne.s32.totalorder %s172, %s174
      %p181 = scmp.eq.s32.totalorder %s33, 1
      %p182 = por %p180, %p181
      %p183 = scmp.ne.s32.totalorder %s174, %s175
      %p184 = scmp.eq.s32.totalorder %s33, 0
      %p185 = por %p183, %p184
      %p186 = scmp.ne.s32.totalorder %s174, %s175
      %p187 = scmp.eq.s32.totalorder %s34, 1
      %p188 = por %p186, %p187
      %p190 = scmp.ne.s32.totalorder %s175, %s189
      %p191 = scmp.eq.s32.totalorder %s34, 0
      %p192 = por %p190, %p191
      %s194 = sadd.s32 %s193, 1
      %p197 = scmp.eq.s32.totalorder %s28, 1
      %p198 = scmp.ne.s32.totalorder %s193, %s195
      %p199 = scmp.eq.s32.totalorder %s28, 0
      %p200 = por %p198, %p199
      %p201 = scmp.ne.s32.totalorder %s193, %s195
      %p202 = scmp.eq.s32.totalorder %s33, 1
      %p203 = por %p201, %p202
      %p204 = scmp.ne.s32.totalorder %s195, %s196
      %p205 = scmp.eq.s32.totalorder %s33, 0
      %p206 = por %p204, %p205
      %p207 = scmp.ne.s32.totalorder %s195, %s196
      %p208 = scmp.eq.s32.totalorder %s34, 1
      %p209 = por %p207, %p208
      %p211 = scmp.ne.s32.totalorder %s196, %s210
      %p212 = scmp.eq.s32.totalorder %s34, 0
      %p213 = por %p211, %p212
      %s215 = sadd.s32 %s214, 1
      %p218 = scmp.eq.s32.totalorder %s28, 1
      %p219 = scmp.ne.s32.totalorder %s214, %s216
      %p220 = scmp.eq.s32.totalorder %s28, 0
      %p221 = por %p219, %p220
      %p222 = scmp.ne.s32.totalorder %s214, %s216
      %p223 = scmp.eq.s32.totalorder %s33, 1
      %p224 = por %p222, %p223
      %p225 = scmp.ne.s32.totalorder %s216, %s217
      %p226 = scmp.eq.s32.totalorder %s33, 0
      %p227 = por %p225, %p226
      %p228 = scmp.ne.s32.totalorder %s216, %s217
      %p229 = scmp.eq.s32.totalorder %s34, 1
      %p230 = por %p228, %p229
      %p232 = scmp.ne.s32.totalorder %s217, %s231
      %p233 = scmp.eq.s32.totalorder %s34, 0
      %p234 = por %p232, %p233
      %s236 = sadd.s32 %s235, 1
      %p239 = scmp.eq.s32.totalorder %s28, 1
      %p240 = scmp.ne.s32.totalorder %s235, %s237
      %p241 = scmp.eq.s32.totalorder %s28, 0
      %p242 = por %p240, %p241
      %p243 = scmp.ne.s32.totalorder %s235, %s237
      %p244 = scmp.eq.s32.totalorder %s33, 1
      %p245 = por %p243, %p244
      %p246 = scmp.ne.s32.totalorder %s237, %s238
      %p247 = scmp.eq.s32.totalorder %s33, 0
      %p248 = por %p246, %p247
      %p249 = scmp.ne.s32.totalorder %s237, %s238
      %p250 = scmp.eq.s32.totalorder %s34, 1
      %p251 = por %p249, %p250
      %p253 = scmp.ne.s32.totalorder %s238, %s252
      %p254 = scmp.eq.s32.totalorder %s34, 0
      %p255 = por %p253, %p254
      %s257 = sadd.s32 %s256, 1
      %p260 = scmp.eq.s32.totalorder %s28, 1
      %p261 = scmp.ne.s32.totalorder %s256, %s258
      %p262 = scmp.eq.s32.totalorder %s28, 0
      %p263 = por %p261, %p262
      %p264 = scmp.ne.s32.totalorder %s256, %s258
      %p265 = scmp.eq.s32.totalorder %s33, 1
      %p266 = por %p264, %p265
      %p267 = scmp.ne.s32.totalorder %s258, %s259
      %p268 = scmp.eq.s32.totalorder %s33, 0
      %p269 = por %p267, %p268
      %p270 = scmp.ne.s32.totalorder %s258, %s259
      %p271 = scmp.eq.s32.totalorder %s34, 1
      %p272 = por %p270, %p271
      %p274 = scmp.ne.s32.totalorder %s259, %s273
      %p275 = scmp.eq.s32.totalorder %s34, 0
      %p276 = por %p274, %p275
      %s278 = sadd.s32 %s277, 1
      %p281 = scmp.eq.s32.totalorder %s28, 1
      %p282 = scmp.ne.s32.totalorder %s277, %s279
      %p283 = scmp.eq.s32.totalorder %s28, 0
      %p284 = por %p282, %p283
      %p285 = scmp.ne.s32.totalorder %s277, %s279
      %p286 = scmp.eq.s32.totalorder %s33, 1
      %p287 = por %p285, %p286
      %p288 = scmp.ne.s32.totalorder %s279, %s280
      %p289 = scmp.eq.s32.totalorder %s33, 0
      %p290 = por %p288, %p289
      %p291 = scmp.ne.s32.totalorder %s279, %s280
      %p292 = scmp.eq.s32.totalorder %s34, 1
      %p293 = por %p291, %p292
      %p295 = scmp.ne.s32.totalorder %s280, %s294
      %p296 = scmp.eq.s32.totalorder %s34, 0
      %p297 = por %p295, %p296
      %s299 = sadd.s32 %s298, 1
      %p302 = scmp.eq.s32.totalorder %s28, 1
      %p303 = scmp.ne.s32.totalorder %s298, %s300
      %p304 = scmp.eq.s32.totalorder %s28, 0
      %p305 = por %p303, %p304
      %p306 = scmp.ne.s32.totalorder %s298, %s300
      %p307 = scmp.eq.s32.totalorder %s33, 1
      %p308 = por %p306, %p307
      %p309 = scmp.ne.s32.totalorder %s300, %s301
      %p310 = scmp.eq.s32.totalorder %s33, 0
      %p311 = por %p309, %p310
      %p312 = scmp.ne.s32.totalorder %s300, %s301
      %p313 = scmp.eq.s32.totalorder %s34, 1
      %p314 = por %p312, %p313
      %p316 = scmp.ne.s32.totalorder %s301, %s315
      %p317 = scmp.eq.s32.totalorder %s34, 0
      %p318 = por %p316, %p317
      %s320 = sadd.s32 %s319, 1
      %p323 = scmp.eq.s32.totalorder %s28, 1
      %p324 = scmp.ne.s32.totalorder %s319, %s321
      %p325 = scmp.eq.s32.totalorder %s28, 0
      %p326 = por %p324, %p325
      %p327 = scmp.ne.s32.totalorder %s319, %s321
      %p328 = scmp.eq.s32.totalorder %s33, 1
      %p329 = por %p327, %p328
      %p330 = scmp.ne.s32.totalorder %s321, %s322
      %p331 = scmp.eq.s32.totalorder %s33, 0
      %p332 = por %p330, %p331
      %p333 = scmp.ne.s32.totalorder %s321, %s322
      %p334 = scmp.eq.s32.totalorder %s34, 1
      %p335 = por %p333, %p334
      %p337 = scmp.ne.s32.totalorder %s322, %s336
      %p338 = scmp.eq.s32.totalorder %s34, 0
      %p339 = por %p337, %p338
      %s340 = ssub.s32 %s28, %s35
      %p341 = scmp.eq.s32.totalorder %s340, 0
      %s343 = sadd.s32 %s342, 1
      %s344 = scalar_select %p341, %s342, %s343
      %p347 = pneg %p341
      %p348 = scmp.eq.s32.totalorder %s28, 1
      %p349 = por %p347, %p348
      %p350 = scmp.ne.s32.totalorder %s342, %s345
      %p351 = scmp.eq.s32.totalorder %s28, 0
      %p352 = por %p350, %p351
      %p353 = scmp.ne.s32.totalorder %s342, %s345
      %p354 = scmp.eq.s32.totalorder %s33, 1
      %p355 = por %p353, %p354
      %p356 = scmp.ne.s32.totalorder %s345, %s346
      %p357 = scmp.eq.s32.totalorder %s33, 0
      %p358 = por %p356, %p357
      %p359 = scmp.ne.s32.totalorder %s345, %s346
      %p360 = scmp.eq.s32.totalorder %s34, 1
      %p361 = por %p359, %p360
      %p363 = scmp.ne.s32.totalorder %s346, %s362
      %p364 = scmp.eq.s32.totalorder %s34, 0
      %p365 = por %p363, %p364
      %s366 = ssub.s32 %s28, %s35
      %p367 = scmp.eq.s32.totalorder %s366, 0
      %s369 = sadd.s32 %s368, 1
      %s370 = scalar_select %p367, %s368, %s369
      %p373 = pneg %p367
      %p374 = scmp.eq.s32.totalorder %s28, 1
      %p375 = por %p373, %p374
      %p376 = scmp.ne.s32.totalorder %s368, %s371
      %p377 = scmp.eq.s32.totalorder %s28, 0
      %p378 = por %p376, %p377
      %p379 = scmp.ne.s32.totalorder %s368, %s371
      %p380 = scmp.eq.s32.totalorder %s33, 1
      %p381 = por %p379, %p380
      %p382 = scmp.ne.s32.totalorder %s371, %s372
      %p383 = scmp.eq.s32.totalorder %s33, 0
      %p384 = por %p382, %p383
      %p385 = scmp.ne.s32.totalorder %s371, %s372
      %p386 = scmp.eq.s32.totalorder %s34, 1
      %p387 = por %p385, %p386
      %p389 = scmp.ne.s32.totalorder %s372, %s388
      %p390 = scmp.eq.s32.totalorder %s34, 0
      %p391 = por %p389, %p390
      %p392 = scmp.le.s32.totalorder 1, %s28
      %p393 = scmp.lt.s32.totalorder %s28, 3
      %p394 = pnand %p392, %p393
      %p395 = pneg %p394
      // Predicated region
      $region9: #{tpu_custom_call.1} parent=5 // pred_check
        _
      $region10: #{tpu_custom_call.1} parent=5 // pred_check_branch
        %397 = sbr.rel (%p394) target = $region12
      $region11: #{tpu_custom_call.1} parent=5 // pred_region
        %s398 = ssub.s32 %s28, 1
        // Predicated region
        $region13: #{tpu_custom_call.1} parent=11 // pred_check
          %p399 = pneg %p101
        $region14: #{tpu_custom_call.1} parent=11 // pred_check_branch
          %401 = sbr.rel (%p399) target = $region16
        $region15: #{tpu_custom_call.1} parent=11 // pred_region
          _
        $region16: #{tpu_custom_call.1} parent=11 // pred_fallthru
          _
        // Predicated region
        $region17: #{tpu_custom_call.1} parent=11 // pred_check
          %p402 = pneg %p122
        $region18: #{tpu_custom_call.1} parent=11 // pred_check_branch
          %404 = sbr.rel (%p402) target = $region20
        $region19: #{tpu_custom_call.1} parent=11 // pred_region
          _
        $region20: #{tpu_custom_call.1} parent=11 // pred_fallthru
          _
        // Predicated region
        $region21: #{tpu_custom_call.1} parent=11 // pred_check
          %p405 = pneg %p143
        $region22: #{tpu_custom_call.1} parent=11 // pred_check_branch
          %407 = sbr.rel (%p405) target = $region24
        $region23: #{tpu_custom_call.1} parent=11 // pred_region
          _
        $region24: #{tpu_custom_call.1} parent=11 // pred_fallthru
          _
        // Predicated region
        $region25: #{tpu_custom_call.1} parent=11 // pred_check
          %p408 = pneg %p164
        $region26: #{tpu_custom_call.1} parent=11 // pred_check_branch
          %410 = sbr.rel (%p408) target = $region28
        $region27: #{tpu_custom_call.1} parent=11 // pred_region
          _
        $region28: #{tpu_custom_call.1} parent=11 // pred_fallthru
          _
        // Predicated region
        $region29: #{tpu_custom_call.1} parent=11 // pred_check
          %p411 = pneg %p185
        $region30: #{tpu_custom_call.1} parent=11 // pred_check_branch
          %413 = sbr.rel (%p411) target = $region32
        $region31: #{tpu_custom_call.1} parent=11 // pred_region
          _
        $region32: #{tpu_custom_call.1} parent=11 // pred_fallthru
          _
        // Predicated region
        $region33: #{tpu_custom_call.1} parent=11 // pred_check
          %p414 = pneg %p206
        $region34: #{tpu_custom_call.1} parent=11 // pred_check_branch
          %416 = sbr.rel (%p414) target = $region36
        $region35: #{tpu_custom_call.1} parent=11 // pred_region
          _
        $region36: #{tpu_custom_call.1} parent=11 // pred_fallthru
          _
        // Predicated region
        $region37: #{tpu_custom_call.1} parent=11 // pred_check
          %p417 = pneg %p227
        $region38: #{tpu_custom_call.1} parent=11 // pred_check_branch
          %419 = sbr.rel (%p417) target = $region40
        $region39: #{tpu_custom_call.1} parent=11 // pred_region
          _
        $region40: #{tpu_custom_call.1} parent=11 // pred_fallthru
          _
        // Predicated region
        $region41: #{tpu_custom_call.1} parent=11 // pred_check
          %p420 = pneg %p248
        $region42: #{tpu_custom_call.1} parent=11 // pred_check_branch
          %422 = sbr.rel (%p420) target = $region44
        $region43: #{tpu_custom_call.1} parent=11 // pred_region
          _
        $region44: #{tpu_custom_call.1} parent=11 // pred_fallthru
          _
        // Predicated region
        $region45: #{tpu_custom_call.1} parent=11 // pred_check
          %p423 = pneg %p269
        $region46: #{tpu_custom_call.1} parent=11 // pred_check_branch
          %425 = sbr.rel (%p423) target = $region48
        $region47: #{tpu_custom_call.1} parent=11 // pred_region
          _
        $region48: #{tpu_custom_call.1} parent=11 // pred_fallthru
          _
        // Predicated region
        $region49: #{tpu_custom_call.1} parent=11 // pred_check
          %p426 = pneg %p290
        $region50: #{tpu_custom_call.1} parent=11 // pred_check_branch
          %428 = sbr.rel (%p426) target = $region52
        $region51: #{tpu_custom_call.1} parent=11 // pred_region
          _
        $region52: #{tpu_custom_call.1} parent=11 // pred_fallthru
          _
        // Predicated region
        $region53: #{tpu_custom_call.1} parent=11 // pred_check
          %p429 = pneg %p311
        $region54: #{tpu_custom_call.1} parent=11 // pred_check_branch
          %431 = sbr.rel (%p429) target = $region56
        $region55: #{tpu_custom_call.1} parent=11 // pred_region
          _
        $region56: #{tpu_custom_call.1} parent=11 // pred_fallthru
          _
        // Predicated region
        $region57: #{tpu_custom_call.1} parent=11 // pred_check
          %p432 = pneg %p332
        $region58: #{tpu_custom_call.1} parent=11 // pred_check_branch
          %434 = sbr.rel (%p432) target = $region60
        $region59: #{tpu_custom_call.1} parent=11 // pred_region
          _
        $region60: #{tpu_custom_call.1} parent=11 // pred_fallthru
          _
      $region12: #{tpu_custom_call.1} parent=5 // pred_fallthru
        _
      %p435 = scmp.lt.s32.totalorder %s28, 2
      // Predicated region
      $region61: #{tpu_custom_call.1} parent=5 // pred_check
        %p436 = pneg %p435
      $region62: #{tpu_custom_call.1} parent=5 // pred_check_branch
        %438 = sbr.rel (%p436) target = $region64
      $region63: #{tpu_custom_call.1} parent=5 // pred_region
        // Predicated region
        $region65: #{tpu_custom_call.1} parent=63 // pred_check
          %p439 = pneg %p48
        $region66: #{tpu_custom_call.1} parent=63 // pred_check_branch
          %441 = sbr.rel (%p439) target = $region68
        $region67: #{tpu_custom_call.1} parent=63 // pred_region
          %p442 = scmp.lt.s32.totalorder %s28, 1
          %s443 = scalar_select %p442, %s28, 1
          %s444 = smul.addr %s443, 8
          %s445 = scalar_lea.vmem %s0, %s444
        $region68: #{tpu_custom_call.1} parent=63 // pred_fallthru
          _
        // Predicated region
        $region69: #{tpu_custom_call.1} parent=63 // pred_check
          %p446 = pneg %p74
        $region70: #{tpu_custom_call.1} parent=63 // pred_check_branch
          %448 = sbr.rel (%p446) target = $region72
        $region71: #{tpu_custom_call.1} parent=63 // pred_region
          %p449 = scmp.lt.s32.totalorder %s28, 1
          %s450 = scalar_select %p449, %s28, 1
          %s451 = scalar_lea.vmem %s1, %s450
        $region72: #{tpu_custom_call.1} parent=63 // pred_fallthru
          _
      $region64: #{tpu_custom_call.1} parent=5 // pred_fallthru
        _
      %p452 = scmp.le.s32.totalorder 1, %s28
      %p453 = scmp.lt.s32.totalorder %s28, 3
      %p454 = pnand %p452, %p453
      %p455 = pneg %p454
      // Predicated region
      $region73: #{tpu_custom_call.1} parent=5 // pred_check
        _
      $region74: #{tpu_custom_call.1} parent=5 // pred_check_branch
        %457 = sbr.rel (%p454) target = $region76
      $region75: #{tpu_custom_call.1} parent=5 // pred_region
        %s458 = ssub.s32 %s28, 1
        %p459 = scmp.lt.s32.totalorder %s33, 1
        %s460 = scalar_select %p459, %s33, 1
        %s461 = smul.addr %s460, 8
        %s462 = scalar_lea.vmem %s0, %s461
        %p463 = pneg %p54
        %p464 = pneg %p51
        %p465 = scmp.lt.s32.totalorder %s33, 1
        %s466 = scalar_select %p465, %s33, 1
        %s467 = scalar_lea.vmem %s1, %s466
        %p468 = pneg %p80
        %p469 = pneg %p77
        %p470 = pneg %p101
        %p471 = pneg %p98
        %p472 = pneg %p122
        %p473 = pneg %p119
        %p474 = pneg %p143
        %p475 = pneg %p140
        %p476 = pneg %p164
        %p477 = pneg %p161
        %p478 = pneg %p185
        %p479 = pneg %p182
        %p480 = pneg %p206
        %p481 = pneg %p203
        %p482 = pneg %p227
        %p483 = pneg %p224
        %p484 = pneg %p248
        %p485 = pneg %p245
        %p486 = pneg %p269
        %p487 = pneg %p266
        %p488 = pneg %p290
        %p489 = pneg %p287
        %p490 = pneg %p311
        %p491 = pneg %p308
        %p492 = pneg %p332
        %p493 = pneg %p329
        %p494 = pneg %p358
        %p495 = pneg %p355
        %s496 = sand.u32 %s345, 1
        %s497 = scalar_lea.sflag [#allocation3], %s496
        %s498 = sand.u32 %s345, 1
        %s499 = smul.addr %s498, 8
        %s500 = scalar_lea.vmem [#allocation2], %s499
        %p501 = pneg %p384
        %p502 = pneg %p381
        %s503 = sand.u32 %s371, 1
        %s504 = scalar_lea.sflag [#allocation5], %s503
        %s505 = sand.u32 %s371, 1
        %s506 = smul.addr %s505, 16
        %s507 = scalar_lea.vmem [#allocation4], %s506
        %p508 = scmp.lt.s32.totalorder %s33, 1
        %s509 = scalar_select %p508, %s33, 1
        %s510 = smul.addr %s509, 8
        %s511 = scalar_lea.vmem %s0, %s510
        %p512 = scmp.lt.s32.totalorder %s33, 1
        %s513 = scalar_select %p512, %s33, 1
        %s514 = scalar_lea.vmem %s1, %s513
        %v516 = vld [vmem:[%s511] sm:$0xff]
        %v517 = vld [vmem:[%s514] sm:$0x1]
        %vm518 = vcmp.eq.f32.partialorder %v517, 0.0
        %v519 = vld [vmem:[%s2] sm:$0x1]
        %v520 = vld [vmem:[%s3] sm:$0x1]
        %vm521 = vcmask 261120
        %v522 = vsel %vm521, %v516, 0.0
        %523 = vadd.xlane.f32.xlu0 %v522
        %v524 = vpop.xlane.xlu0 %523
        %v525 = vrcp.pop 32.0
        %v526 = vmul.f32 %v524, %v525
        %v527 = vsub.f32 %v516, %v526
        %v528 = vmul.f32 %v527, %v527
        %v529 = vsel %vm521, %v528, 0.0
        %530 = vadd.xlane.f32.xlu0 %v529
        %v531 = vpop.xlane.xlu0 %530
        %v532 = vmul.f32 %v531, %v525
        %v533 = vadd.f32 %v532, 1e-05
        %v534 = vrsqrt.pop %v533
        %v535 = vmul.f32 %v527, %v534
        %v537 = vlaneseq
        %v538 = vshrl.u32 %v537, 7
        %v539 = vsub.s32 0, %v538
        %v540 = vrot.slane %v519, %v539
        %v542 = vmul.f32 %v535, %v540
        %v544 = vlaneseq
        %v545 = vshrl.u32 %v544, 7
        %v546 = vsub.s32 0, %v545
        %v547 = vrot.slane %v520, %v546
        %v549 = vadd.f32 %v542, %v547
        %v550 = vpack.c.bf16 %v549, %v549
        %v551 = vld [vmem:[%s4] sm:$0xf]
        %v552 = vld [vmem:[%s4 + $0x4] sm:$0xf]
        %v553 = vld [vmem:[%s4 + $0x8] sm:$0xf]
        %v554 = vld [vmem:[%s4 + $0xc] sm:$0xf]
        %v555 = vld [vmem:[%s5] sm:$0x1]
        %v557 = vlaneseq
        %v558 = vshrl.u32 %v557, 7
        %v559 = vsub.s32 0, %v558
        %v560 = vrot.slane %v555, %v559
        %v566 = vunpack.c.l.b16 %v551
        %v567 = vunpack.c.l.b16 %v552
        %v568 = vunpack.c.l.b16 %v553
        %v569 = vunpack.c.l.b16 %v554
        %v570 = vpack.c.b16 %v567, %v566
        %v571 = vpack.c.b16 %v569, %v568
        %v575 = vsel %vm521, %v550, 0
        %577 = vmatprep.subr.bf16.mxu0 0
        %578 = vmatpush1.bf16.msra.mxu0 %v570
        %579 = vmatprep.subr.bf16.mxu0 0
        %580 = vmatpush1.bf16.msra.mxu0 %v571
        %581 = vmatprep.subr.bf16.mxu0 0
        %582 = vmatpush1.bf16.msra.mxu0 0
        %583 = vmatprep.subr.bf16.mxu0 0
        %584 = vmatpush1.bf16.msra.mxu0 0
        %585 = vmatprep.subr.bf16.mxu0 0
        %586 = vmatpush1.bf16.msra.mxu0 0
        %587 = vmatprep.subr.bf16.mxu0 0
        %588 = vmatpush1.bf16.msra.mxu0 0
        %589 = vmatprep.subr.bf16.mxu0 0
        %590 = vmatpush1.bf16.msra.mxu0 0
        %591 = vmatprep.subr.bf16.mxu0 0
        %592 = vmatpush1.bf16.msra.mxu0 0
        %593 = vmatprep.subr.bf16.mxu0 0
        %594 = vmatpush1.bf16.msra.mxu0 0
        %595 = vmatprep.subr.bf16.mxu0 0
        %596 = vmatpush1.bf16.msra.mxu0 0
        %597 = vmatprep.subr.bf16.mxu0 0
        %598 = vmatpush1.bf16.msra.mxu0 0
        %599 = vmatprep.subr.bf16.mxu0 0
        %600 = vmatpush1.bf16.msra.mxu0 0
        %601 = vmatprep.subr.bf16.mxu0 0
        %602 = vmatpush1.bf16.msra.mxu0 0
        %603 = vmatprep.subr.bf16.mxu0 0
        %604 = vmatpush1.bf16.msra.mxu0 0
        %605 = vmatprep.subr.bf16.mxu0 0
        %606 = vmatpush1.bf16.msra.mxu0 0
        %607 = vmatprep.subr.bf16.mxu0 0
        %608 = vmatpush1.bf16.msra.mxu0 0
        %609 = vmatprep.mubr.bf16.mxu0 0
        %610 = vmatmul.mubr.bf16.gmra.mrb[0].mxu0 %v575
        %v611 = vpop.f32.mrb[0].mxu0
        %v612 = vadd.f32 %v560, %v611
        %v613 = vpop.f32.mrb[0].mxu0
        %v614 = vpop.f32.mrb[0].mxu0
        %v615 = vpop.f32.mrb[0].mxu0
        %616 = vdwg.mxu0
        %v617 = vpack.c.bf16 %v612, %v612
        %619 = vrot.lane.b32.xlu0 %v617, 96
        %v620 = vpop.permute.xlu0 %619
        %vm621 = vcmask 64512
        %v623 = vsel %vm621, %v617, 0
        %v626 = vsel %vm621, %v620, 0
        %628 = vmatprep.subr.bf16.mxu0 0
        %629 = vmatpush1.bf16.xpose.msra.mxu0 %v626
        %630 = vmatprep.subr.bf16.mxu0 0
        %631 = vmatpush1.bf16.xpose.msra.mxu0 0
        %632 = vmatprep.subr.bf16.mxu0 0
        %633 = vmatpush1.bf16.xpose.msra.mxu0 0
        %634 = vmatprep.subr.bf16.mxu0 0
        %635 = vmatpush1.bf16.xpose.msra.mxu0 0
        %636 = vmatprep.subr.bf16.mxu0 0
        %637 = vmatpush1.bf16.xpose.msra.mxu0 0
        %638 = vmatprep.subr.bf16.mxu0 0
        %639 = vmatpush1.bf16.xpose.msra.mxu0 0
        %640 = vmatprep.subr.bf16.mxu0 0
        %641 = vmatpush1.bf16.xpose.msra.mxu0 0
        %642 = vmatprep.subr.bf16.mxu0 0
        %643 = vmatpush1.bf16.xpose.msra.mxu0 0
        %644 = vmatprep.subr.bf16.mxu0 0
        %645 = vmatpush1.bf16.xpose.msra.mxu0 0
        %646 = vmatprep.subr.bf16.mxu0 0
        %647 = vmatpush1.bf16.xpose.msra.mxu0 0
        %648 = vmatprep.subr.bf16.mxu0 0
        %649 = vmatpush1.bf16.xpose.msra.mxu0 0
        %650 = vmatprep.subr.bf16.mxu0 0
        %651 = vmatpush1.bf16.xpose.msra.mxu0 0
        %652 = vmatprep.subr.bf16.mxu0 0
        %653 = vmatpush1.bf16.xpose.msra.mxu0 0
        %654 = vmatprep.subr.bf16.mxu0 0
        %655 = vmatpush1.bf16.xpose.msra.mxu0 0
        %656 = vmatprep.subr.bf16.mxu0 0
        %657 = vmatpush1.bf16.xpose.msra.mxu0 0
        %658 = vmatprep.subr.bf16.mxu0 0
        %659 = vmatpush1.bf16.xpose.msra.mxu0 0
        %660 = vmatprep.mubr.bf16.mxu0 0
        %661 = vmatmul.mubr.bf16.gmra.mrb[0].mxu0 %v623
        %v662 = vpop.f32.mrb[0].mxu0
        %v663 = vadd.f32 0.0, %v662
        %v664 = vpop.f32.mrb[0].mxu0
        %v665 = vpop.f32.mrb[0].mxu0
        %v666 = vpop.f32.mrb[0].mxu0
        %667 = vdwg.mxu0
        %v668 = vsel %vm518, 1, 0
        %v669 = vlaneseq
        %v670 = vshrl.u32 %v669, 7
        %v671 = vsub.s32 0, %v670
        %v672 = vrot.slane %v668, %v671
        %vm673 = vcmp.eq.s32.totalorder %v672, 1
        %v674 = vsel %vm673, -1e+09, %v663
        %v675 = vsel %vm621, %v674, -inf
        %676 = vmax.xlane.f32.xlu0 %v675
        %v677 = vpop.xlane.xlu0 %676
        %v678 = vsub.f32 %v674, %v677
        %v679 = vmul.f32 %v678, 1.442695
        %v680 = vpow.pop %v679
        %v681 = vsel %vm621, %v680, 0.0
        %682 = vadd.xlane.f32.xlu0 %v681
        %v683 = vpop.xlane.xlu0 %682
        %v684 = vrcp.pop %v683
        %v685 = vmul.f32 %v680, %v684
        %v686 = vpack.c.bf16 %v685, %v685
        %vm687 = vcmask 60416
        %688 = vst.msk [vmem:[%s507] sm:$0xf] %vm687, %v686
        %689 = vrot.lane.b32.xlu0 %v617, 64
        %v690 = vpop.permute.xlu0 %689
        %v692 = vsel %vm621, %v686, 0
        %vm694 = vcmask 1043456
        %v696 = vsel %vm694, %v690, 0
        %698 = vmatprep.subr.bf16.mxu0 0
        %699 = vmatpush1.bf16.msra.mxu0 %v696
        %700 = vmatprep.subr.bf16.mxu0 0
        %701 = vmatpush1.bf16.msra.mxu0 0
        %702 = vmatprep.subr.bf16.mxu0 0
        %703 = vmatpush1.bf16.msra.mxu0 0
        %704 = vmatprep.subr.bf16.mxu0 0
        %705 = vmatpush1.bf16.msra.mxu0 0
        %706 = vmatprep.subr.bf16.mxu0 0
        %707 = vmatpush1.bf16.msra.mxu0 0
        %708 = vmatprep.subr.bf16.mxu0 0
        %709 = vmatpush1.bf16.msra.mxu0 0
        %710 = vmatprep.subr.bf16.mxu0 0
        %711 = vmatpush1.bf16.msra.mxu0 0
        %712 = vmatprep.subr.bf16.mxu0 0
        %713 = vmatpush1.bf16.msra.mxu0 0
        %714 = vmatprep.subr.bf16.mxu0 0
        %715 = vmatpush1.bf16.msra.mxu0 0
        %716 = vmatprep.subr.bf16.mxu0 0
        %717 = vmatpush1.bf16.msra.mxu0 0
        %718 = vmatprep.subr.bf16.mxu0 0
        %719 = vmatpush1.bf16.msra.mxu0 0
        %720 = vmatprep.subr.bf16.mxu0 0
        %721 = vmatpush1.bf16.msra.mxu0 0
        %722 = vmatprep.subr.bf16.mxu0 0
        %723 = vmatpush1.bf16.msra.mxu0 0
        %724 = vmatprep.subr.bf16.mxu0 0
        %725 = vmatpush1.bf16.msra.mxu0 0
        %726 = vmatprep.subr.bf16.mxu0 0
        %727 = vmatpush1.bf16.msra.mxu0 0
        %728 = vmatprep.subr.bf16.mxu0 0
        %729 = vmatpush1.bf16.msra.mxu0 0
        %730 = vmatprep.mubr.bf16.mxu0 0
        %731 = vmatmul.mubr.bf16.gmra.mrb[0].mxu0 %v692
        %v732 = vpop.f32.mrb[0].mxu0
        %v733 = vadd.f32 0.0, %v732
        %v734 = vpop.f32.mrb[0].mxu0
        %v735 = vpop.f32.mrb[0].mxu0
        %v736 = vpop.f32.mrb[0].mxu0
        %737 = vdwg.mxu0
        %738 = vrot.lane.b32.xlu0 %v617, 120
        %v739 = vpop.permute.xlu0 %738
        %740 = vrot.lane.b32.xlu0 %v617, 88
        %v741 = vpop.permute.xlu0 %740
        %v743 = vsel %vm621, %v739, 0
        %v746 = vsel %vm621, %v741, 0
        %748 = vmatprep.subr.bf16.mxu0 0
        %749 = vmatpush1.bf16.xpose.msra.mxu0 %v746
        %750 = vmatprep.subr.bf16.mxu0 0
        %751 = vmatpush1.bf16.xpose.msra.mxu0 0
        %752 = vmatprep.subr.bf16.mxu0 0
        %753 = vmatpush1.bf16.xpose.msra.mxu0 0
        %754 = vmatprep.subr.bf16.mxu0 0
        %755 = vmatpush1.bf16.xpose.msra.mxu0 0
        %756 = vmatprep.subr.bf16.mxu0 0
        %757 = vmatpush1.bf16.xpose.msra.mxu0 0
        %758 = vmatprep.subr.bf16.mxu0 0
        %759 = vmatpush1.bf16.xpose.msra.mxu0 0
        %760 = vmatprep.subr.bf16.mxu0 0
        %761 = vmatpush1.bf16.xpose.msra.mxu0 0
        %762 = vmatprep.subr.bf16.mxu0 0
        %763 = vmatpush1.bf16.xpose.msra.mxu0 0
        %764 = vmatprep.subr.bf16.mxu0 0
        %765 = vmatpush1.bf16.xpose.msra.mxu0 0
        %766 = vmatprep.subr.bf16.mxu0 0
        %767 = vmatpush1.bf16.xpose.msra.mxu0 0
        %768 = vmatprep.subr.bf16.mxu0 0
        %769 = vmatpush1.bf16.xpose.msra.mxu0 0
        %770 = vmatprep.subr.bf16.mxu0 0
        %771 = vmatpush1.bf16.xpose.msra.mxu0 0
        %772 = vmatprep.subr.bf16.mxu0 0
        %773 = vmatpush1.bf16.xpose.msra.mxu0 0
        %774 = vmatprep.subr.bf16.mxu0 0
        %775 = vmatpush1.bf16.xpose.msra.mxu0 0
        %776 = vmatprep.subr.bf16.mxu0 0
        %777 = vmatpush1.bf16.xpose.msra.mxu0 0
        %778 = vmatprep.subr.bf16.mxu0 0
        %779 = vmatpush1.bf16.xpose.msra.mxu0 0
        %780 = vmatprep.mubr.bf16.mxu0 0
        %781 = vmatmul.mubr.bf16.gmra.mrb[0].mxu0 %v743
        %v782 = vpop.f32.mrb[0].mxu0
        %v783 = vadd.f32 0.0, %v782
        %v784 = vpop.f32.mrb[0].mxu0
        %v785 = vpop.f32.mrb[0].mxu0
        %v786 = vpop.f32.mrb[0].mxu0
        %787 = vdwg.mxu0
        %v788 = vsel %vm673, -1e+09, %v783
        %v789 = vsel %vm621, %v788, -inf
        %790 = vmax.xlane.f32.xlu0 %v789
        %v791 = vpop.xlane.xlu0 %790
        %v792 = vsub.f32 %v788, %v791
        %v793 = vmul.f32 %v792, 1.442695
        %v794 = vpow.pop %v793
        %v795 = vsel %vm621, %v794, 0.0
        %796 = vadd.xlane.f32.xlu0 %v795
        %v797 = vpop.xlane.xlu0 %796
        %v798 = vrcp.pop %v797
        %v799 = vmul.f32 %v794, %v798
        %v800 = vpack.c.bf16 %v799, %v799
        %s801 = scalar_lea.vmem %s507, 4 [#allocation4]
        %802 = vst.msk [vmem:[%s801] sm:$0xf] %vm687, %v800
        %803 = vrot.lane.b32.xlu0 %v617, 56
        %v804 = vpop.permute.xlu0 %803
        %v806 = vsel %vm621, %v800, 0
        %v809 = vsel %vm694, %v804, 0
        %811 = vmatprep.subr.bf16.mxu0 0
        %812 = vmatpush1.bf16.msra.mxu0 %v809
        %813 = vmatprep.subr.bf16.mxu0 0
        %814 = vmatpush1.bf16.msra.mxu0 0
        %815 = vmatprep.subr.bf16.mxu0 0
        %816 = vmatpush1.bf16.msra.mxu0 0
        %817 = vmatprep.subr.bf16.mxu0 0
        %818 = vmatpush1.bf16.msra.mxu0 0
        %819 = vmatprep.subr.bf16.mxu0 0
        %820 = vmatpush1.bf16.msra.mxu0 0
        %821 = vmatprep.subr.bf16.mxu0 0
        %822 = vmatpush1.bf16.msra.mxu0 0
        %823 = vmatprep.subr.bf16.mxu0 0
        %824 = vmatpush1.bf16.msra.mxu0 0
        %825 = vmatprep.subr.bf16.mxu0 0
        %826 = vmatpush1.bf16.msra.mxu0 0
        %827 = vmatprep.subr.bf16.mxu0 0
        %828 = vmatpush1.bf16.msra.mxu0 0
        %829 = vmatprep.subr.bf16.mxu0 0
        %830 = vmatpush1.bf16.msra.mxu0 0
        %831 = vmatprep.subr.bf16.mxu0 0
        %832 = vmatpush1.bf16.msra.mxu0 0
        %833 = vmatprep.subr.bf16.mxu0 0
        %834 = vmatpush1.bf16.msra.mxu0 0
        %835 = vmatprep.subr.bf16.mxu0 0
        %836 = vmatpush1.bf16.msra.mxu0 0
        %837 = vmatprep.subr.bf16.mxu0 0
        %838 = vmatpush1.bf16.msra.mxu0 0
        %839 = vmatprep.subr.bf16.mxu0 0
        %840 = vmatpush1.bf16.msra.mxu0 0
        %841 = vmatprep.subr.bf16.mxu0 0
        %842 = vmatpush1.bf16.msra.mxu0 0
        %843 = vmatprep.mubr.bf16.mxu0 0
        %844 = vmatmul.mubr.bf16.gmra.mrb[0].mxu0 %v806
        %v845 = vpop.f32.mrb[0].mxu0
        %v846 = vadd.f32 0.0, %v845
        %v847 = vpop.f32.mrb[0].mxu0
        %v848 = vpop.f32.mrb[0].mxu0
        %v849 = vpop.f32.mrb[0].mxu0
        %850 = vdwg.mxu0
        %851 = vrot.lane.b32.xlu0 %v617, 112
        %v852 = vpop.permute.xlu0 %851
        %853 = vrot.lane.b32.xlu0 %v617, 80
        %v854 = vpop.permute.xlu0 %853
        %v856 = vsel %vm621, %v852, 0
        %v859 = vsel %vm621, %v854, 0
        %861 = vmatprep.subr.bf16.mxu0 0
        %862 = vmatpush1.bf16.xpose.msra.mxu0 %v859
        %863 = vmatprep.subr.bf16.mxu0 0
        %864 = vmatpush1.bf16.xpose.msra.mxu0 0
        %865 = vmatprep.subr.bf16.mxu0 0
        %866 = vmatpush1.bf16.xpose.msra.mxu0 0
        %867 = vmatprep.subr.bf16.mxu0 0
        %868 = vmatpush1.bf16.xpose.msra.mxu0 0
        %869 = vmatprep.subr.bf16.mxu0 0
        %870 = vmatpush1.bf16.xpose.msra.mxu0 0
        %871 = vmatprep.subr.bf16.mxu0 0
        %872 = vmatpush1.bf16.xpose.msra.mxu0 0
        %873 = vmatprep.subr.bf16.mxu0 0
        %874 = vmatpush1.bf16.xpose.msra.mxu0 0
        %875 = vmatprep.subr.bf16.mxu0 0
        %876 = vmatpush1.bf16.xpose.msra.mxu0 0
        %877 = vmatprep.subr.bf16.mxu0 0
        %878 = vmatpush1.bf16.xpose.msra.mxu0 0
        %879 = vmatprep.subr.bf16.mxu0 0
        %880 = vmatpush1.bf16.xpose.msra.mxu0 0
        %881 = vmatprep.subr.bf16.mxu0 0
        %882 = vmatpush1.bf16.xpose.msra.mxu0 0
        %883 = vmatprep.subr.bf16.mxu0 0
        %884 = vmatpush1.bf16.xpose.msra.mxu0 0
        %885 = vmatprep.subr.bf16.mxu0 0
        %886 = vmatpush1.bf16.xpose.msra.mxu0 0
        %887 = vmatprep.subr.bf16.mxu0 0
        %888 = vmatpush1.bf16.xpose.msra.mxu0 0
        %889 = vmatprep.subr.bf16.mxu0 0
        %890 = vmatpush1.bf16.xpose.msra.mxu0 0
        %891 = vmatprep.subr.bf16.mxu0 0
        %892 = vmatpush1.bf16.xpose.msra.mxu0 0
        %893 = vmatprep.mubr.bf16.mxu0 0
        %894 = vmatmul.mubr.bf16.gmra.mrb[0].mxu0 %v856
        %v895 = vpop.f32.mrb[0].mxu0
        %v896 = vadd.f32 0.0, %v895
        %v897 = vpop.f32.mrb[0].mxu0
        %v898 = vpop.f32.mrb[0].mxu0
        %v899 = vpop.f32.mrb[0].mxu0
        %900 = vdwg.mxu0
        %v901 = vsel %vm673, -1e+09, %v896
        %v902 = vsel %vm621, %v901, -inf
        %903 = vmax.xlane.f32.xlu0 %v902
        %v904 = vpop.xlane.xlu0 %903
        %v905 = vsub.f32 %v901, %v904
        %v906 = vmul.f32 %v905, 1.442695
        %v907 = vpow.pop %v906
        %v908 = vsel %vm621, %v907, 0.0
        %909 = vadd.xlane.f32.xlu0 %v908
        %v910 = vpop.xlane.xlu0 %909
        %v911 = vrcp.pop %v910
        %v912 = vmul.f32 %v907, %v911
        %v913 = vpack.c.bf16 %v912, %v912
        %s914 = scalar_lea.vmem %s507, 8 [#allocation4]
        %915 = vst.msk [vmem:[%s914] sm:$0xf] %vm687, %v913
        %916 = vrot.lane.b32.xlu0 %v617, 48
        %v917 = vpop.permute.xlu0 %916
        %v919 = vsel %vm621, %v913, 0
        %v922 = vsel %vm694, %v917, 0
        %924 = vmatprep.subr.bf16.mxu0 0
        %925 = vmatpush1.bf16.msra.mxu0 %v922
        %926 = vmatprep.subr.bf16.mxu0 0
        %927 = vmatpush1.bf16.msra.mxu0 0
        %928 = vmatprep.subr.bf16.mxu0 0
        %929 = vmatpush1.bf16.msra.mxu0 0
        %930 = vmatprep.subr.bf16.mxu0 0
        %931 = vmatpush1.bf16.msra.mxu0 0
        %932 = vmatprep.subr.bf16.mxu0 0
        %933 = vmatpush1.bf16.msra.mxu0 0
        %934 = vmatprep.subr.bf16.mxu0 0
        %935 = vmatpush1.bf16.msra.mxu0 0
        %936 = vmatprep.subr.bf16.mxu0 0
        %937 = vmatpush1.bf16.msra.mxu0 0
        %938 = vmatprep.subr.bf16.mxu0 0
        %939 = vmatpush1.bf16.msra.mxu0 0
        %940 = vmatprep.subr.bf16.mxu0 0
        %941 = vmatpush1.bf16.msra.mxu0 0
        %942 = vmatprep.subr.bf16.mxu0 0
        %943 = vmatpush1.bf16.msra.mxu0 0
        %944 = vmatprep.subr.bf16.mxu0 0
        %945 = vmatpush1.bf16.msra.mxu0 0
        %946 = vmatprep.subr.bf16.mxu0 0
        %947 = vmatpush1.bf16.msra.mxu0 0
        %948 = vmatprep.subr.bf16.mxu0 0
        %949 = vmatpush1.bf16.msra.mxu0 0
        %950 = vmatprep.subr.bf16.mxu0 0
        %951 = vmatpush1.bf16.msra.mxu0 0
        %952 = vmatprep.subr.bf16.mxu0 0
        %953 = vmatpush1.bf16.msra.mxu0 0
        %954 = vmatprep.subr.bf16.mxu0 0
        %955 = vmatpush1.bf16.msra.mxu0 0
        %956 = vmatprep.mubr.bf16.mxu0 0
        %957 = vmatmul.mubr.bf16.gmra.mrb[0].mxu0 %v919
        %v958 = vpop.f32.mrb[0].mxu0
        %v959 = vadd.f32 0.0, %v958
        %v960 = vpop.f32.mrb[0].mxu0
        %v961 = vpop.f32.mrb[0].mxu0
        %v962 = vpop.f32.mrb[0].mxu0
        %963 = vdwg.mxu0
        %964 = vrot.lane.b32.xlu0 %v617, 104
        %v965 = vpop.permute.xlu0 %964
        %966 = vrot.lane.b32.xlu0 %v617, 72
        %v967 = vpop.permute.xlu0 %966
        %v969 = vsel %vm621, %v965, 0
        %v972 = vsel %vm621, %v967, 0
        %974 = vmatprep.subr.bf16.mxu0 0
        %975 = vmatpush1.bf16.xpose.msra.mxu0 %v972
        %976 = vmatprep.subr.bf16.mxu0 0
        %977 = vmatpush1.bf16.xpose.msra.mxu0 0
        %978 = vmatprep.subr.bf16.mxu0 0
        %979 = vmatpush1.bf16.xpose.msra.mxu0 0
        %980 = vmatprep.subr.bf16.mxu0 0
        %981 = vmatpush1.bf16.xpose.msra.mxu0 0
        %982 = vmatprep.subr.bf16.mxu0 0
        %983 = vmatpush1.bf16.xpose.msra.mxu0 0
        %984 = vmatprep.subr.bf16.mxu0 0
        %985 = vmatpush1.bf16.xpose.msra.mxu0 0
        %986 = vmatprep.subr.bf16.mxu0 0
        %987 = vmatpush1.bf16.xpose.msra.mxu0 0
        %988 = vmatprep.subr.bf16.mxu0 0
        %989 = vmatpush1.bf16.xpose.msra.mxu0 0
        %990 = vmatprep.subr.bf16.mxu0 0
        %991 = vmatpush1.bf16.xpose.msra.mxu0 0
        %992 = vmatprep.subr.bf16.mxu0 0
        %993 = vmatpush1.bf16.xpose.msra.mxu0 0
        %994 = vmatprep.subr.bf16.mxu0 0
        %995 = vmatpush1.bf16.xpose.msra.mxu0 0
        %996 = vmatprep.subr.bf16.mxu0 0
        %997 = vmatpush1.bf16.xpose.msra.mxu0 0
        %998 = vmatprep.subr.bf16.mxu0 0
        %999 = vmatpush1.bf16.xpose.msra.mxu0 0
        %1000 = vmatprep.subr.bf16.mxu0 0
        %1001 = vmatpush1.bf16.xpose.msra.mxu0 0
        %1002 = vmatprep.subr.bf16.mxu0 0
        %1003 = vmatpush1.bf16.xpose.msra.mxu0 0
        %1004 = vmatprep.subr.bf16.mxu0 0
        %1005 = vmatpush1.bf16.xpose.msra.mxu0 0
        %1006 = vmatprep.mubr.bf16.mxu0 0
        %1007 = vmatmul.mubr.bf16.gmra.mrb[0].mxu0 %v969
        %v1008 = vpop.f32.mrb[0].mxu0
        %v1009 = vadd.f32 0.0, %v1008
        %v1010 = vpop.f32.mrb[0].mxu0
        %v1011 = vpop.f32.mrb[0].mxu0
        %v1012 = vpop.f32.mrb[0].mxu0
        %1013 = vdwg.mxu0
        %v1014 = vsel %vm673, -1e+09, %v1009
        %v1015 = vsel %vm621, %v1014, -inf
        %1016 = vmax.xlane.f32.xlu0 %v1015
        %v1017 = vpop.xlane.xlu0 %1016
        %v1018 = vsub.f32 %v1014, %v1017
        %v1019 = vmul.f32 %v1018, 1.442695
        %v1020 = vpow.pop %v1019
        %v1021 = vsel %vm621, %v1020, 0.0
        %1022 = vadd.xlane.f32.xlu0 %v1021
        %v1023 = vpop.xlane.xlu0 %1022
        %v1024 = vrcp.pop %v1023
        %v1025 = vmul.f32 %v1020, %v1024
        %v1026 = vpack.c.bf16 %v1025, %v1025
        %s1027 = scalar_lea.vmem %s507, 12 [#allocation4]
        %1028 = vst.msk [vmem:[%s1027] sm:$0xf] %vm687, %v1026
        %1029 = vrot.lane.b32.xlu0 %v617, 40
        %v1030 = vpop.permute.xlu0 %1029
        %v1032 = vsel %vm621, %v1026, 0
        %v1035 = vsel %vm694, %v1030, 0
        %1037 = vmatprep.subr.bf16.mxu0 0
        %1038 = vmatpush1.bf16.msra.mxu0 %v1035
        %1039 = vmatprep.subr.bf16.mxu0 0
        %1040 = vmatpush1.bf16.msra.mxu0 0
        %1041 = vmatprep.subr.bf16.mxu0 0
        %1042 = vmatpush1.bf16.msra.mxu0 0
        %1043 = vmatprep.subr.bf16.mxu0 0
        %1044 = vmatpush1.bf16.msra.mxu0 0
        %1045 = vmatprep.subr.bf16.mxu0 0
        %1046 = vmatpush1.bf16.msra.mxu0 0
        %1047 = vmatprep.subr.bf16.mxu0 0
        %1048 = vmatpush1.bf16.msra.mxu0 0
        %1049 = vmatprep.subr.bf16.mxu0 0
        %1050 = vmatpush1.bf16.msra.mxu0 0
        %1051 = vmatprep.subr.bf16.mxu0 0
        %1052 = vmatpush1.bf16.msra.mxu0 0
        %1053 = vmatprep.subr.bf16.mxu0 0
        %1054 = vmatpush1.bf16.msra.mxu0 0
        %1055 = vmatprep.subr.bf16.mxu0 0
        %1056 = vmatpush1.bf16.msra.mxu0 0
        %1057 = vmatprep.subr.bf16.mxu0 0
        %1058 = vmatpush1.bf16.msra.mxu0 0
        %1059 = vmatprep.subr.bf16.mxu0 0
        %1060 = vmatpush1.bf16.msra.mxu0 0
        %1061 = vmatprep.subr.bf16.mxu0 0
        %1062 = vmatpush1.bf16.msra.mxu0 0
        %1063 = vmatprep.subr.bf16.mxu0 0
        %1064 = vmatpush1.bf16.msra.mxu0 0
        %1065 = vmatprep.subr.bf16.mxu0 0
        %1066 = vmatpush1.bf16.msra.mxu0 0
        %1067 = vmatprep.subr.bf16.mxu0 0
        %1068 = vmatpush1.bf16.msra.mxu0 0
        %1069 = vmatprep.mubr.bf16.mxu0 0
        %1070 = vmatmul.mubr.bf16.gmra.mrb[0].mxu0 %v1032
        %v1071 = vpop.f32.mrb[0].mxu0
        %v1072 = vadd.f32 0.0, %v1071
        %v1073 = vpop.f32.mrb[0].mxu0
        %v1074 = vpop.f32.mrb[0].mxu0
        %v1075 = vpop.f32.mrb[0].mxu0
        %1076 = vdwg.mxu0
        %1078 = vrot.lane.b32.xlu0 %v846, 8
        %v1079 = vpop.permute.xlu0 %1078
        %1082 = vrot.lane.b32.xlu0 %v959, 16
        %v1083 = vpop.permute.xlu0 %1082
        %1086 = vrot.lane.b32.xlu0 %v1072, 24
        %v1087 = vpop.permute.xlu0 %1086
        %v1089 = vsel %vm621, %v733, %v1079
        %vm1090 = vcmask 130048
        %v1091 = vsel %vm1090, %v1089, %v1083
        %vm1092 = vcmask 195584
        %v1093 = vsel %vm1092, %v1091, %v1087
        %v1094 = vpack.c.bf16 %v1093, %v1093
        %v1095 = vld [vmem:[%s6] sm:$0xf]
        %v1096 = vld [vmem:[%s6 + $0x4] sm:$0xf]
        %v1097 = vld [vmem:[%s6 + $0x8] sm:$0xf]
        %v1098 = vld [vmem:[%s6 + $0xc] sm:$0xf]
        %v1103 = vunpack.c.l.b16 %v1095
        %v1104 = vunpack.c.l.b16 %v1096
        %v1105 = vunpack.c.l.b16 %v1097
        %v1106 = vunpack.c.l.b16 %v1098
        %v1107 = vpack.c.b16 %v1104, %v1103
        %v1108 = vpack.c.b16 %v1106, %v1105
        %v1112 = vsel %vm521, %v1094, 0
        %1114 = vmatprep.subr.bf16.mxu0 0
        %1115 = vmatpush1.bf16.msra.mxu0 %v1107
        %1116 = vmatprep.subr.bf16.mxu0 0
        %1117 = vmatpush1.bf16.msra.mxu0 %v1108
        %1118 = vmatprep.subr.bf16.mxu0 0
        %1119 = vmatpush1.bf16.msra.mxu0 0
        %1120 = vmatprep.subr.bf16.mxu0 0
        %1121 = vmatpush1.bf16.msra.mxu0 0
        %1122 = vmatprep.subr.bf16.mxu0 0
        %1123 = vmatpush1.bf16.msra.mxu0 0
        %1124 = vmatprep.subr.bf16.mxu0 0
        %1125 = vmatpush1.bf16.msra.mxu0 0
        %1126 = vmatprep.subr.bf16.mxu0 0
        %1127 = vmatpush1.bf16.msra.mxu0 0
        %1128 = vmatprep.subr.bf16.mxu0 0
        %1129 = vmatpush1.bf16.msra.mxu0 0
        %1130 = vmatprep.subr.bf16.mxu0 0
        %1131 = vmatpush1.bf16.msra.mxu0 0
        %1132 = vmatprep.subr.bf16.mxu0 0
        %1133 = vmatpush1.bf16.msra.mxu0 0
        %1134 = vmatprep.subr.bf16.mxu0 0
        %1135 = vmatpush1.bf16.msra.mxu0 0
        %1136 = vmatprep.subr.bf16.mxu0 0
        %1137 = vmatpush1.bf16.msra.mxu0 0
        %1138 = vmatprep.subr.bf16.mxu0 0
        %1139 = vmatpush1.bf16.msra.mxu0 0
        %1140 = vmatprep.subr.bf16.mxu0 0
        %1141 = vmatpush1.bf16.msra.mxu0 0
        %1142 = vmatprep.subr.bf16.mxu0 0
        %1143 = vmatpush1.bf16.msra.mxu0 0
        %1144 = vmatprep.subr.bf16.mxu0 0
        %1145 = vmatpush1.bf16.msra.mxu0 0
        %1146 = vmatprep.mubr.bf16.mxu0 0
        %1147 = vmatmul.mubr.bf16.gmra.mrb[0].mxu0 %v1112
        %v1148 = vpop.f32.mrb[0].mxu0
        %v1149 = vadd.f32 0.0, %v1148
        %v1150 = vpop.f32.mrb[0].mxu0
        %v1151 = vpop.f32.mrb[0].mxu0
        %v1152 = vpop.f32.mrb[0].mxu0
        %1153 = vdwg.mxu0
        %v1154 = vadd.f32 %v516, %v1149
        %v1155 = vld [vmem:[%s7] sm:$0x1]
        %v1157 = vlaneseq
        %v1158 = vshrl.u32 %v1157, 7
        %v1159 = vsub.s32 0, %v1158
        %v1160 = vrot.slane %v1155, %v1159
        %v1162 = vadd.f32 %v1154, %v1160
        %v1163 = vld [vmem:[%s8] sm:$0x1]
        %v1164 = vld [vmem:[%s9] sm:$0x1]
        %v1165 = vsel %vm521, %v1162, 0.0
        %1166 = vadd.xlane.f32.xlu0 %v1165
        %v1167 = vpop.xlane.xlu0 %1166
        %v1168 = vmul.f32 %v1167, %v525
        %v1169 = vsub.f32 %v1162, %v1168
        %v1170 = vmul.f32 %v1169, %v1169
        %v1171 = vsel %vm521, %v1170, 0.0
        %1172 = vadd.xlane.f32.xlu0 %v1171
        %v1173 = vpop.xlane.xlu0 %1172
        %v1174 = vmul.f32 %v1173, %v525
        %v1175 = vadd.f32 %v1174, 1e-05
        %v1176 = vrsqrt.pop %v1175
        %v1177 = vmul.f32 %v1169, %v1176
        %v1179 = vlaneseq
        %v1180 = vshrl.u32 %v1179, 7
        %v1181 = vsub.s32 0, %v1180
        %v1182 = vrot.slane %v1163, %v1181
        %v1184 = vmul.f32 %v1177, %v1182
        %v1186 = vlaneseq
        %v1187 = vshrl.u32 %v1186, 7
        %v1188 = vsub.s32 0, %v1187
        %v1189 = vrot.slane %v1164, %v1188
        %v1191 = vadd.f32 %v1184, %v1189
        %v1192 = vpack.c.bf16 %v1191, %v1191
        %v1193 = vld [vmem:[%s10] sm:$0xf]
        %v1194 = vld [vmem:[%s10 + $0x4] sm:$0xf]
        %v1195 = vld [vmem:[%s10 + $0x8] sm:$0xf]
        %v1196 = vld [vmem:[%s10 + $0xc] sm:$0xf]
        %v1197 = vld [vmem:[%s11] sm:$0x1]
        %v1199 = vlaneseq
        %v1200 = vshrl.u32 %v1199, 7
        %v1201 = vsub.s32 0, %v1200
        %v1202 = vrot.slane %v1197, %v1201
        %v1208 = vunpack.c.l.b16 %v1193
        %v1209 = vunpack.c.l.b16 %v1194
        %v1210 = vunpack.c.l.b16 %v1195
        %v1211 = vunpack.c.l.b16 %v1196
        %v1212 = vpack.c.b16 %v1209, %v1208
        %v1213 = vpack.c.b16 %v1211, %v1210
        %v1217 = vsel %vm521, %v1192, 0
        %1219 = vmatprep.subr.bf16.mxu0 0
        %1220 = vmatpush1.bf16.msra.mxu0 %v1212
        %1221 = vmatprep.subr.bf16.mxu0 0
        %1222 = vmatpush1.bf16.msra.mxu0 %v1213
        %1223 = vmatprep.subr.bf16.mxu0 0
        %1224 = vmatpush1.bf16.msra.mxu0 0
        %1225 = vmatprep.subr.bf16.mxu0 0
        %1226 = vmatpush1.bf16.msra.mxu0 0
        %1227 = vmatprep.subr.bf16.mxu0 0
        %1228 = vmatpush1.bf16.msra.mxu0 0
        %1229 = vmatprep.subr.bf16.mxu0 0
        %1230 = vmatpush1.bf16.msra.mxu0 0
        %1231 = vmatprep.subr.bf16.mxu0 0
        %1232 = vmatpush1.bf16.msra.mxu0 0
        %1233 = vmatprep.subr.bf16.mxu0 0
        %1234 = vmatpush1.bf16.msra.mxu0 0
        %1235 = vmatprep.subr.bf16.mxu0 0
        %1236 = vmatpush1.bf16.msra.mxu0 0
        %1237 = vmatprep.subr.bf16.mxu0 0
        %1238 = vmatpush1.bf16.msra.mxu0 0
        %1239 = vmatprep.subr.bf16.mxu0 0
        %1240 = vmatpush1.bf16.msra.mxu0 0
        %1241 = vmatprep.subr.bf16.mxu0 0
        %1242 = vmatpush1.bf16.msra.mxu0 0
        %1243 = vmatprep.subr.bf16.mxu0 0
        %1244 = vmatpush1.bf16.msra.mxu0 0
        %1245 = vmatprep.subr.bf16.mxu0 0
        %1246 = vmatpush1.bf16.msra.mxu0 0
        %1247 = vmatprep.subr.bf16.mxu0 0
        %1248 = vmatpush1.bf16.msra.mxu0 0
        %1249 = vmatprep.subr.bf16.mxu0 0
        %1250 = vmatpush1.bf16.msra.mxu0 0
        %1251 = vmatprep.mubr.bf16.mxu0 0
        %1252 = vmatmul.mubr.bf16.gmra.mrb[0].mxu0 %v1217
        %v1253 = vpop.f32.mrb[0].mxu0
        %v1254 = vadd.f32 %v1202, %v1253
        %v1255 = vpop.f32.mrb[0].mxu0
        %v1256 = vpop.f32.mrb[0].mxu0
        %v1257 = vpop.f32.mrb[0].mxu0
        %1258 = vdwg.mxu0
        %v1259 = vmax.f32 %v1254, 0.0
        %v1260 = vpack.c.bf16 %v1259, %v1259
        %v1261 = vld [vmem:[%s12] sm:$0xf]
        %v1262 = vld [vmem:[%s12 + $0x4] sm:$0xf]
        %v1263 = vld [vmem:[%s12 + $0x8] sm:$0xf]
        %v1264 = vld [vmem:[%s12 + $0xc] sm:$0xf]
        %v1265 = vld [vmem:[%s12 + $0x10] sm:$0xf]
        %v1266 = vld [vmem:[%s12 + $0x14] sm:$0xf]
        %v1267 = vld [vmem:[%s12 + $0x18] sm:$0xf]
        %v1268 = vld [vmem:[%s12 + $0x1c] sm:$0xf]
        %v1269 = vld [vmem:[%s12 + $0x20] sm:$0xf]
        %v1270 = vld [vmem:[%s12 + $0x24] sm:$0xf]
        %v1271 = vld [vmem:[%s12 + $0x28] sm:$0xf]
        %v1272 = vld [vmem:[%s12 + $0x2c] sm:$0xf]
        %v1273 = vld [vmem:[%s12 + $0x30] sm:$0xf]
        %v1274 = vld [vmem:[%s12 + $0x34] sm:$0xf]
        %v1275 = vld [vmem:[%s12 + $0x38] sm:$0xf]
        %v1276 = vld [vmem:[%s12 + $0x3c] sm:$0xf]
        %v1277 = vld [vmem:[%s13] sm:$0x1]
        %v1279 = vlaneseq
        %v1280 = vshrl.u32 %v1279, 7
        %v1281 = vsub.s32 0, %v1280
        %v1282 = vrot.slane %v1277, %v1281
        %v1300 = vunpack.c.l.b16 %v1261
        %v1301 = vunpack.c.l.b16 %v1262
        %v1302 = vunpack.c.l.b16 %v1263
        %v1303 = vunpack.c.l.b16 %v1264
        %v1304 = vunpack.c.l.b16 %v1265
        %v1305 = vunpack.c.l.b16 %v1266
        %v1306 = vunpack.c.l.b16 %v1267
        %v1307 = vunpack.c.l.b16 %v1268
        %v1308 = vunpack.c.l.b16 %v1269
        %v1309 = vunpack.c.l.b16 %v1270
        %v1310 = vunpack.c.l.b16 %v1271
        %v1311 = vunpack.c.l.b16 %v1272
        %v1312 = vunpack.c.l.b16 %v1273
        %v1313 = vunpack.c.l.b16 %v1274
        %v1314 = vunpack.c.l.b16 %v1275
        %v1315 = vunpack.c.l.b16 %v1276
        %v1316 = vpack.c.b16 %v1301, %v1300
        %v1317 = vpack.c.b16 %v1303, %v1302
        %v1318 = vpack.c.b16 %v1305, %v1304
        %v1319 = vpack.c.b16 %v1307, %v1306
        %v1320 = vpack.c.b16 %v1309, %v1308
        %v1321 = vpack.c.b16 %v1311, %v1310
        %v1322 = vpack.c.b16 %v1313, %v1312
        %v1323 = vpack.c.b16 %v1315, %v1314
        %1332 = vmatprep.subr.bf16.mxu0 0
        %1333 = vmatpush1.bf16.msra.mxu0 %v1316
        %1334 = vmatprep.subr.bf16.mxu0 0
        %1335 = vmatpush1.bf16.msra.mxu0 %v1317
        %1336 = vmatprep.subr.bf16.mxu0 0
        %1337 = vmatpush1.bf16.msra.mxu0 %v1318
        %1338 = vmatprep.subr.bf16.mxu0 0
        %1339 = vmatpush1.bf16.msra.mxu0 %v1319
        %1340 = vmatprep.subr.bf16.mxu0 0
        %1341 = vmatpush1.bf16.msra.mxu0 %v1320
        %1342 = vmatprep.subr.bf16.mxu0 0
        %1343 = vmatpush1.bf16.msra.mxu0 %v1321
        %1344 = vmatprep.subr.bf16.mxu0 0
        %1345 = vmatpush1.bf16.msra.mxu0 %v1322
        %1346 = vmatprep.subr.bf16.mxu0 0
        %1347 = vmatpush1.bf16.msra.mxu0 %v1323
        %1348 = vmatprep.subr.bf16.mxu0 0
        %1349 = vmatpush1.bf16.msra.mxu0 0
        %1350 = vmatprep.subr.bf16.mxu0 0
        %1351 = vmatpush1.bf16.msra.mxu0 0
        %1352 = vmatprep.subr.bf16.mxu0 0
        %1353 = vmatpush1.bf16.msra.mxu0 0
        %1354 = vmatprep.subr.bf16.mxu0 0
        %1355 = vmatpush1.bf16.msra.mxu0 0
        %1356 = vmatprep.subr.bf16.mxu0 0
        %1357 = vmatpush1.bf16.msra.mxu0 0
        %1358 = vmatprep.subr.bf16.mxu0 0
        %1359 = vmatpush1.bf16.msra.mxu0 0
        %1360 = vmatprep.subr.bf16.mxu0 0
        %1361 = vmatpush1.bf16.msra.mxu0 0
        %1362 = vmatprep.subr.bf16.mxu0 0
        %1363 = vmatpush1.bf16.msra.mxu0 0
        %1364 = vmatprep.mubr.bf16.mxu0 0
        %1365 = vmatmul.mubr.bf16.gmra.mrb[0].mxu0 %v1260
        %v1366 = vpop.f32.mrb[0].mxu0
        %v1367 = vadd.f32 %v1282, %v1366
        %v1368 = vpop.f32.mrb[0].mxu0
        %v1369 = vpop.f32.mrb[0].mxu0
        %v1370 = vpop.f32.mrb[0].mxu0
        %1371 = vdwg.mxu0
        %v1372 = vadd.f32 %v1162, %v1367
        %1373 = vst.msk [vmem:[%s500] sm:$0xff] %vm521, %v1372
        %s1374 = sand.u32 %s345, 1
        %s1375 = scalar_lea.sflag [#allocation3], %s1374
        %s1376 = sand.u32 %s345, 1
        %s1377 = smul.addr %s1376, 8
        %s1378 = scalar_lea.vmem [#allocation2], %s1377
        %s1379 = sand.u32 %s371, 1
        %s1380 = scalar_lea.sflag [#allocation5], %s1379
        %s1381 = sand.u32 %s371, 1
        %s1382 = smul.addr %s1381, 16
        %s1383 = scalar_lea.vmem [#allocation4], %s1382
        // Predicated region
        $region77: #{tpu_custom_call.1} parent=75 // pred_check
          %p1384 = pneg %p355
        $region78: #{tpu_custom_call.1} parent=75 // pred_check_branch
          %1386 = sbr.rel (%p1384) target = $region80
        $region79: #{tpu_custom_call.1} parent=75 // pred_region
          %s1388 = ssub.s32 128, 128
          %1389 = vsyncadd %s1375, %s1388
          %s1390 = smul.addr %s33, 128
          %s1391 = scalar_lea.hbm %s14, %s1390
          %s1393 = sshll.u32 %s1378, 4
          %s1394 = int_to_ptr.vmem [resolvable:$true] %s1393
          %1396 = dma.vmem_to_hbm [thread:$0]  %s1394, 128, %s1391, %s1375
        $region80: #{tpu_custom_call.1} parent=75 // pred_fallthru
          _
        // Predicated region
        $region81: #{tpu_custom_call.1} parent=75 // pred_check
          %p1397 = pneg %p381
        $region82: #{tpu_custom_call.1} parent=75 // pred_check_branch
          %1399 = sbr.rel (%p1397) target = $region84
        $region83: #{tpu_custom_call.1} parent=75 // pred_region
          %s1401 = ssub.s32 256, 256
          %1402 = vsyncadd %s1380, %s1401
          %s1403 = smul.addr %s33, 4
          %s1404 = smul.addr %s1403, 64
          %s1405 = scalar_lea.hbm %s15, %s1404
          %s1406 = sshll.u32 %s1383, 4
          %s1407 = int_to_ptr.vmem [resolvable:$true] %s1406
          %1412 = dma.vmem_to_hbm [thread:$0]  %s1407, 256, %s1405, %s1380, 64, 64, 4
        $region84: #{tpu_custom_call.1} parent=75 // pred_fallthru
          _
      $region76: #{tpu_custom_call.1} parent=5 // pred_fallthru
        _
      %p1413 = scmp.le.s32.totalorder 2, %s28
      // Predicated region
      $region85: #{tpu_custom_call.1} parent=5 // pred_check
        %p1414 = pneg %p1413
      $region86: #{tpu_custom_call.1} parent=5 // pred_check_branch
        %1416 = sbr.rel (%p1414) target = $region88
      $region87: #{tpu_custom_call.1} parent=5 // pred_region
        %s1417 = ssub.s32 %s28, 2
        // Predicated region
        $region89: #{tpu_custom_call.1} parent=87 // pred_check
          %p1418 = pneg %p361
        $region90: #{tpu_custom_call.1} parent=87 // pred_check_branch
          %1420 = sbr.rel (%p1418) target = $region92
        $region91: #{tpu_custom_call.1} parent=87 // pred_region
          %s1421 = sand.u32 %s346, 1
          %s1422 = scalar_lea.sflag [#allocation3], %s1421
          %s1423 = sand.u32 %s346, 1
          %s1424 = smul.addr %s1423, 8
          %s1425 = scalar_lea.vmem [#allocation2], %s1424
          %1426 = dma.done %s1422, 128
        $region92: #{tpu_custom_call.1} parent=87 // pred_fallthru
          _
        // Predicated region
        $region93: #{tpu_custom_call.1} parent=87 // pred_check
          %p1427 = pneg %p387
        $region94: #{tpu_custom_call.1} parent=87 // pred_check_branch
          %1429 = sbr.rel (%p1427) target = $region96
        $region95: #{tpu_custom_call.1} parent=87 // pred_region
          %s1430 = sand.u32 %s372, 1
          %s1431 = scalar_lea.sflag [#allocation5], %s1430
          %s1432 = sand.u32 %s372, 1
          %s1433 = smul.addr %s1432, 16
          %s1434 = scalar_lea.vmem [#allocation4], %s1433
          %1435 = dma.done %s1431, 256
        $region96: #{tpu_custom_call.1} parent=87 // pred_fallthru
          _
      $region88: #{tpu_custom_call.1} parent=5 // pred_fallthru
        _
    $region6: #{tpu_custom_call.1} parent=1 // loop_footer
      %s32 = sadd.s32 1, %s28
    $region7: #{tpu_custom_call.1} parent=1 // loop_footer_branch
      %27 = sbr.rel target = $region3
    $region8: #{tpu_custom_call.1} parent=1 // loop_exit
      _
    %1436 = vsyncpa [#allocation3], 1
    %s1437 = scalar_lea.sflag [#allocation3], 1
    %1438 = vsyncpa %s1437, 1
    %1439 = vsyncpa [#allocation5], 1
    %s1440 = scalar_lea.sflag [#allocation5], 1
    %1441 = vsyncpa %s1440, 1

</llo_original>
